<compile_context>
chip_gen: v7x
topology: tpu7x:2x2x1
jax: 0.10.0
libtpu: 0.0.40
codegen_flags: <defaults>
</compile_context>

<pallas_src>
import functools

import jax
import jax.numpy as jnp
from jax.experimental import pallas as pl
from jax.experimental.pallas import tpu as pltpu


# For real (~1K) image sizes raise this to 64-96 MiB on v5e/v6e; keep below the
# 64 MiB physical VMEM on v7x (and tile W in multiples of sf*128 there).
_VMEM_LIMIT = 48 * 1024 * 1024


# --------------------- HyperNet: fused 1x1-conv MLP kernel ---------------------
def _hyper_kernel(x_ref, w1_ref, b1_ref, w2_ref, b2_ref, w3_ref, b3_ref, o_ref):
    x = x_ref[...]                                                    # (N, Cin)
    h = jnp.dot(x, w1_ref[...], preferred_element_type=jnp.float32) + b1_ref[...]
    h = jnp.maximum(h, 0.0)                                           # ReLU
    h = jnp.dot(h, w2_ref[...], preferred_element_type=jnp.float32) + b2_ref[...]
    h = jnp.maximum(h, 0.0)                                           # ReLU
    h = jnp.dot(h, w3_ref[...], preferred_element_type=jnp.float32) + b3_ref[...]
    # Softplus (numerically stable): max(x, 0) + log(1 + exp(-|x|))
    o_ref[...] = jnp.maximum(h, 0.0) + jnp.log(1.0 + jnp.exp(-jnp.abs(h)))


def hypernet_apply(x_nchw, params):
    # 1x1 conv == per-pixel matmul over channels.  Called ONCE per forward.
    B, Cin, H, W = x_nchw.shape
    n = B * H * W
    x_flat = jnp.transpose(x_nchw, (0, 2, 3, 1)).reshape(n, Cin)
    out_nc = params["w3"].shape[1]
    out_flat = pl.pallas_call(
        _hyper_kernel,
        out_shape=jax.ShapeDtypeStruct((n, out_nc), jnp.float32),
    )(x_flat, params["w1"], params["b1"], params["w2"], params["b2"],
      params["w3"], params["b3"])
    return jnp.transpose(out_flat.reshape(B, H, W, out_nc), (0, 3, 1, 2))


# --------------------- DataNet: frequency-domain data step ---------------------
def _datanet_kernel(alpha_ref, fr_re_ref, fr_im_ref, fk_re_ref, fk_im_ref,
                    fx_re_ref, fx_im_ref, *, sf):
    b = pl.program_id(0)
    alpha = alpha_ref[b]                      # scalar f32 from SMEM (prefetched)

    fr_re = fr_re_ref[0]                      # (C, H, W)
    fr_im = fr_im_ref[0]
    fk_re = fk_re_ref[0, 0]                   # (H, W) — shared across the grid
    fk_im = fk_im_ref[0, 0]
    _, H, W = fr_re.shape
    Hs, Ws = H // sf, W // sf

    # FCK = conj(FK), F2K = |FK|^2 derived in-kernel (no extra HBM slabs).
    fck_re = fk_re
    fck_im = -fk_im
    f2k = fk_re * fk_re + fk_im * fk_im

    # FK * FR (complex multiply, split into real / imag parts)
    fkfr_re = fk_re * fr_re - fk_im * fr_im
    fkfr_im = fk_re * fr_im + fk_im * fr_re

    # splits_and_mean: mean over the sf x sf polyphase blocks (last two axes)
    def block_mean(a):
        acc = None
        for i in range(sf):
            for j in range(sf):
                blk = a[..., i * Hs:(i + 1) * Hs, j * Ws:(j + 1) * Ws]
                acc = blk if acc is None else acc + blk
        return acc * (1.0 / (sf * sf))

    m_re = block_mean(fkfr_re)                # (C, Hs, Ws)
    m_im = block_mean(fkfr_im)
    m_f2 = block_mean(f2k)                    # (Hs, Ws)

    inv_den = 1.0 / (m_f2 + alpha)
    r_re = m_re * inv_den
    r_im = m_im * inv_den

    # .repeat(1, 1, sf, sf): tile the (Hs, Ws) block back to (H, W)
    def tile_sf(a):
        row = jnp.concatenate([a] * sf, axis=-1)
        return jnp.concatenate([row] * sf, axis=-2)

    t_re = tile_sf(r_re)
    t_im = tile_sf(r_im)

    # FCK * tiled ratio (complex multiply)
    c_re = fck_re * t_re - fck_im * t_im
    c_im = fck_re * t_im + fck_im * t_re

    inv_alpha = 1.0 / alpha
    fx_re_ref[0] = (fr_re - c_re) * inv_alpha
    fx_im_ref[0] = (fr_im - c_im) * inv_alpha


def _scale_kernel(alpha_ref, y_ref, mask_ref, o_ref):
    a = alpha_ref[pl.program_id(0)]           # scalar f32 from SMEM (prefetched)
    o_ref[0] = y_ref[0] * (a + 1.0) / (a + mask_ref[0, 0])


def datanet_apply(x, FK_re, FK_im, FCKFSHy, alpha, sf, mask):
    B, C, H, W = x.shape

    # FFTs stay in JAX (no Pallas FFT primitive); everything else is in-kernel.
    FR = FCKFSHy + jnp.fft.fft2(alpha * x)
    fr_re = jnp.real(FR).astype(jnp.float32)
    fr_im = jnp.imag(FR).astype(jnp.float32)
    alpha_b = alpha.reshape(B).astype(jnp.float32)

    slab_spec = pl.BlockSpec((1, C, H, W), lambda b, *_: (b, 0, 0, 0))
    fk_spec = pl.BlockSpec((1, 1, H, W), lambda b, *_: (0, 0, 0, 0))
    mask_spec = pl.BlockSpec((1, 1, H, W), lambda b, *_: (b, 0, 0, 0))

    cp = pltpu.CompilerParams(dimension_semantics=("parallel",),
                              vmem_limit_bytes=_VMEM_LIMIT)

    fx_re, fx_im = pl.pallas_call(
        functools.partial(_datanet_kernel, sf=sf),
        grid_spec=pltpu.PrefetchScalarGridSpec(
            num_scalar_prefetch=1,
            grid=(B,),
            in_specs=[slab_spec, slab_spec, fk_spec, fk_spec],
            out_specs=[slab_spec, slab_spec],
        ),
        out_shape=[jax.ShapeDtypeStruct((B, C, H, W), jnp.float32)] * 2,
        compiler_params=cp,
    )(alpha_b, fr_re, fr_im, FK_re, FK_im)

    FX = jax.lax.complex(fx_re, fx_im)
    y = jnp.real(jnp.fft.ifft2(FX)).astype(jnp.float32)

    out = pl.pallas_call(
        _scale_kernel,
        grid_spec=pltpu.PrefetchScalarGridSpec(
            num_scalar_prefetch=1,
            grid=(B,),
            in_specs=[slab_spec, mask_spec],
            out_specs=slab_spec,
        ),
        out_shape=jax.ShapeDtypeStruct((B, C, H, W), jnp.float32),
        compiler_params=cp,
    )(alpha_b, y, mask.astype(jnp.float32))
    return out


# --------------------- defaultnet: glue (FFT prep + iteration loop) ------------
def prepare_frequency_components(R_img, L_img, k, sf):
    B, C, H, W = R_img.shape
    kh, kw = k.shape[-2], k.shape[-1]
    # The blur kernel is shared across (b, c): build FK once at (1, 1, H, W).
    K = jnp.zeros((1, 1, H, W), jnp.float32)
    K = K.at[..., :kw, :kw].set(k)            # reference uses k.size(-1) for both dims
    K = jnp.roll(K, shift=(-(kh // 2), -(kw // 2)), axis=(2, 3))
    FK = jnp.fft.fft2(K)                      # (1, 1, H, W) complex64
    FCK = jnp.conj(FK)
    SHy = jnp.zeros_like(R_img)
    SHy = SHy.at[..., 0::sf, 0::sf].set(L_img)
    FCKFSHy = FCK * jnp.fft.fft2(SHy)         # broadcasts to (B, C, H, W)
    FK_re = jnp.real(FK).astype(jnp.float32)
    FK_im = jnp.imag(FK).astype(jnp.float32)
    return FK_re, FK_im, FCKFSHy


def defaultnet_forward(R_img, L_img, k, sigma, mask, params, *, sr, sf, iter_num):
    FK_re, FK_im, FCKFSHy = prepare_frequency_components(R_img, L_img, k, sf)
    hyper_in = jnp.concatenate([sigma, jnp.full_like(sigma, sr)], axis=1)  # (B,2,1,1)
    ab = hypernet_apply(hyper_in, params)       # (B, 2*iter_num, 1, 1) — hoisted out of loop
    for i in range(iter_num):
        alpha = ab[:, i:i + 1, :, :]            # (B, 1, 1, 1)
        R_img = datanet_apply(R_img, FK_re, FK_im, FCKFSHy, alpha, sf, mask)
        # TODO(synk): ResUNet (self.p) definition is not provided in the reference
        # module; the denoiser/prior step is left out (identity) rather than faked.
    return R_img


if __name__ == "__main__":
    B, C, H, W = 2, 3, 16, 16
    sf = 2
    iter_num = 3
    channel = 64
    out_nc = 2 * iter_num
    sr = 0.25
    kh = kw = 5

    keys = jax.random.split(jax.random.PRNGKey(0), 11)
    R_img = jax.random.normal(keys[0], (B, C, H, W), jnp.float32)
    L_img = jax.random.normal(keys[1], (B, C, H // sf, W // sf), jnp.float32)
    blur = jax.random.uniform(keys[2], (kh, kw), jnp.float32) + 0.1
    blur = blur / jnp.sum(blur)
    sigma = jax.random.uniform(keys[3], (B, 1, 1, 1), jnp.float32) * 0.1
    mask = jax.random.uniform(keys[4], (B, 1, H, W), jnp.float32)

    params = {
        "w1": jax.random.normal(keys[5], (2, channel), jnp.float32) * 0.5,
        "b1": jax.random.normal(keys[6], (1, channel), jnp.float32) * 0.1,
        "w2": jax.random.normal(keys[7], (channel, channel), jnp.float32) * 0.1,
        "b2": jax.random.normal(keys[8], (1, channel), jnp.float32) * 0.1,
        "w3": jax.random.normal(keys[9], (channel, out_nc), jnp.float32) * 0.1,
        "b3": jax.random.normal(keys[10], (1, out_nc), jnp.float32) * 0.1,
    }

    fwd = jax.jit(functools.partial(defaultnet_forward, sr=sr, sf=sf, iter_num=iter_num))
    out = fwd(R_img, L_img, blur, sigma, mask, params)
    jax.block_until_ready(out)
    assert out.shape == (B, C, H, W) and out.dtype == jnp.float32
    assert bool(jnp.all(jnp.isfinite(out)))
    print("KERNEL_OK")
</pallas_src>

<mosaic_0001>
module attributes {stable_mosaic.version = 11 : i64} {
  func.func @_hyper_kernel(%arg0: memref<2x2xf32, #tpu.memory_space<vmem>>, %arg1: memref<2x64xf32, #tpu.memory_space<vmem>>, %arg2: memref<1x64xf32, #tpu.memory_space<vmem>>, %arg3: memref<64x64xf32, #tpu.memory_space<vmem>>, %arg4: memref<1x64xf32, #tpu.memory_space<vmem>>, %arg5: memref<64x6xf32, #tpu.memory_space<vmem>>, %arg6: memref<1x6xf32, #tpu.memory_space<vmem>>, %arg7: memref<2x6xf32, #tpu.memory_space<vmem>>) attributes {dimension_semantics = [], scalar_prefetch = 0 : i64, scratch_operands = 0 : i64, tpu.core_type = #tpu.core_type<tc>} {
    %c0 = arith.constant 0 : index
    %c0_0 = arith.constant 0 : index
    %0 = vector.load %arg0[%c0, %c0_0] : memref<2x2xf32, #tpu.memory_space<vmem>>, vector<2x2xf32>
    %c0_1 = arith.constant 0 : index
    %c0_2 = arith.constant 0 : index
    %1 = vector.load %arg1[%c0_1, %c0_2] : memref<2x64xf32, #tpu.memory_space<vmem>>, vector<2x64xf32>
    %cst = arith.constant dense<0.000000e+00> : vector<2x64xf32>
    %2 = tpu.matmul %0, %1, %cst {dimension_numbers = #tpu.dot_dimension_numbers<[1], [0], [0], [1], [0, 0, 1, 1], [], []>} : vector<2x2xf32>, vector<2x64xf32>, vector<2x64xf32> -> vector<2x64xf32>
    %c0_3 = arith.constant 0 : index
    %c0_4 = arith.constant 0 : index
    %3 = vector.load %arg2[%c0_3, %c0_4] : memref<1x64xf32, #tpu.memory_space<vmem>>, vector<1x64xf32>
    %4 = vector.broadcast %3 : vector<1x64xf32> to vector<2x64xf32>
    %5 = arith.addf %2, %4 : vector<2x64xf32>
    %cst_5 = arith.constant 0.000000e+00 : f32
    %6 = vector.broadcast %cst_5 : f32 to vector<2x64xf32>
    %7 = arith.maximumf %5, %6 : vector<2x64xf32>
    %c0_6 = arith.constant 0 : index
    %c0_7 = arith.constant 0 : index
    %8 = vector.load %arg3[%c0_6, %c0_7] : memref<64x64xf32, #tpu.memory_space<vmem>>, vector<64x64xf32>
    %cst_8 = arith.constant dense<0.000000e+00> : vector<2x64xf32>
    %9 = tpu.matmul %7, %8, %cst_8 {dimension_numbers = #tpu.dot_dimension_numbers<[1], [0], [0], [1], [0, 0, 1, 1], [], []>} : vector<2x64xf32>, vector<64x64xf32>, vector<2x64xf32> -> vector<2x64xf32>
    %c0_9 = arith.constant 0 : index
    %c0_10 = arith.constant 0 : index
    %10 = vector.load %arg4[%c0_9, %c0_10] : memref<1x64xf32, #tpu.memory_space<vmem>>, vector<1x64xf32>
    %11 = vector.broadcast %10 : vector<1x64xf32> to vector<2x64xf32>
    %12 = arith.addf %9, %11 : vector<2x64xf32>
    %cst_11 = arith.constant 0.000000e+00 : f32
    %13 = vector.broadcast %cst_11 : f32 to vector<2x64xf32>
    %14 = arith.maximumf %12, %13 : vector<2x64xf32>
    %c0_12 = arith.constant 0 : index
    %c0_13 = arith.constant 0 : index
    %15 = vector.load %arg5[%c0_12, %c0_13] : memref<64x6xf32, #tpu.memory_space<vmem>>, vector<64x6xf32>
    %cst_14 = arith.constant dense<0.000000e+00> : vector<2x6xf32>
    %16 = tpu.matmul %14, %15, %cst_14 {dimension_numbers = #tpu.dot_dimension_numbers<[1], [0], [0], [1], [0, 0, 1, 1], [], []>} : vector<2x64xf32>, vector<64x6xf32>, vector<2x6xf32> -> vector<2x6xf32>
    %c0_15 = arith.constant 0 : index
    %c0_16 = arith.constant 0 : index
    %17 = vector.load %arg6[%c0_15, %c0_16] : memref<1x6xf32, #tpu.memory_space<vmem>>, vector<1x6xf32>
    %18 = vector.broadcast %17 : vector<1x6xf32> to vector<2x6xf32>
    %19 = arith.addf %16, %18 : vector<2x6xf32>
    %cst_17 = arith.constant 0.000000e+00 : f32
    %20 = vector.broadcast %cst_17 : f32 to vector<2x6xf32>
    %21 = arith.maximumf %19, %20 : vector<2x6xf32>
    %22 = math.absf %19 : vector<2x6xf32>
    %cst_18 = arith.constant 0.000000e+00 : f32
    %23 = vector.broadcast %cst_18 : f32 to vector<2x6xf32>
    %24 = arith.subf %23, %22 : vector<2x6xf32>
    %25 = math.exp %24 : vector<2x6xf32>
    %cst_19 = arith.constant 1.000000e+00 : f32
    %26 = vector.broadcast %cst_19 : f32 to vector<2x6xf32>
    %27 = arith.addf %26, %25 : vector<2x6xf32>
    %28 = math.log %27 : vector<2x6xf32>
    %29 = arith.addf %21, %28 : vector<2x6xf32>
    %c0_20 = arith.constant 0 : index
    %c0_21 = arith.constant 0 : index
    %30 = vector.load %arg7[%c0_20, %c0_21] : memref<2x6xf32, #tpu.memory_space<vmem>>, vector<2x6xf32>
    tpu.vector_store %arg7[%c0_20, %c0_21], %29 {strides = array<i32>} : memref<2x6xf32, #tpu.memory_space<vmem>>, vector<2x6xf32>,
    return
  }
}

module attributes {stable_mosaic.version = 11 : i64} {
  func.func @_datanet_kernel(%arg0: i32, %arg1: memref<2xf32, #tpu.memory_space<smem>>, %arg2: memref<1x3x16x16xf32, #tpu.memory_space<vmem>>, %arg3: memref<1x3x16x16xf32, #tpu.memory_space<vmem>>, %arg4: memref<1x1x16x16xf32, #tpu.memory_space<vmem>>, %arg5: memref<1x1x16x16xf32, #tpu.memory_space<vmem>>, %arg6: memref<1x3x16x16xf32, #tpu.memory_space<vmem>>, %arg7: memref<1x3x16x16xf32, #tpu.memory_space<vmem>>) attributes {dimension_semantics = [#tpu.dimension_semantics<parallel>], iteration_bounds = array<i64: 2>, scalar_prefetch = 1 : i64, scratch_operands = 0 : i64, tpu.core_type = #tpu.core_type<tc>, window_params = [{transform_indices = @transform_0, window_bounds = array<i64: 1, 3, 16, 16>}, {transform_indices = @transform_1, window_bounds = array<i64: 1, 3, 16, 16>}, {pipeline_mode = #tpu.pipeline_mode<synchronous>, transform_indices = @transform_2, window_bounds = array<i64: 1, 1, 16, 16>}, {pipeline_mode = #tpu.pipeline_mode<synchronous>, transform_indices = @transform_3, window_bounds = array<i64: 1, 1, 16, 16>}, {transform_indices = @transform_4, window_bounds = array<i64: 1, 3, 16, 16>}, {transform_indices = @transform_5, window_bounds = array<i64: 1, 3, 16, 16>}]} {
    %0 = arith.index_cast %arg0 : i32 to index
    %1 = memref.load %arg1[%0] : memref<2xf32, #tpu.memory_space<smem>>
    %c0 = arith.constant 0 : index
    %c0_0 = arith.constant 0 : index
    %c0_1 = arith.constant 0 : index
    %c0_2 = arith.constant 0 : index
    %2 = vector.load %arg2[%c0, %c0_0, %c0_1, %c0_2] : memref<1x3x16x16xf32, #tpu.memory_space<vmem>>, vector<1x3x16x16xf32>
    %3 = vector.shape_cast %2 : vector<1x3x16x16xf32> to vector<3x16x16xf32>
    %c0_3 = arith.constant 0 : index
    %c0_4 = arith.constant 0 : index
    %c0_5 = arith.constant 0 : index
    %c0_6 = arith.constant 0 : index
    %4 = vector.load %arg3[%c0_3, %c0_4, %c0_5, %c0_6] : memref<1x3x16x16xf32, #tpu.memory_space<vmem>>, vector<1x3x16x16xf32>
    %5 = vector.shape_cast %4 : vector<1x3x16x16xf32> to vector<3x16x16xf32>
    %c0_7 = arith.constant 0 : index
    %c0_8 = arith.constant 0 : index
    %c0_9 = arith.constant 0 : index
    %c0_10 = arith.constant 0 : index
    %6 = vector.load %arg4[%c0_7, %c0_8, %c0_9, %c0_10] : memref<1x1x16x16xf32, #tpu.memory_space<vmem>>, vector<1x1x16x16xf32>
    %7 = vector.shape_cast %6 : vector<1x1x16x16xf32> to vector<16x16xf32>
    %c0_11 = arith.constant 0 : index
    %c0_12 = arith.constant 0 : index
    %c0_13 = arith.constant 0 : index
    %c0_14 = arith.constant 0 : index
    %8 = vector.load %arg5[%c0_11, %c0_12, %c0_13, %c0_14] : memref<1x1x16x16xf32, #tpu.memory_space<vmem>>, vector<1x1x16x16xf32>
    %9 = vector.shape_cast %8 : vector<1x1x16x16xf32> to vector<16x16xf32>
    %cst = arith.constant 0.000000e+00 : f32
    %10 = vector.broadcast %cst : f32 to vector<16x16xf32>
    %11 = arith.subf %10, %9 : vector<16x16xf32>
    %12 = arith.mulf %7, %7 : vector<16x16xf32>
    %13 = arith.mulf %9, %9 : vector<16x16xf32>
    %14 = arith.addf %12, %13 : vector<16x16xf32>
    %15 = vector.shape_cast %7 : vector<16x16xf32> to vector<1x16x16xf32>
    %16 = vector.broadcast %15 : vector<1x16x16xf32> to vector<3x16x16xf32>
    %17 = arith.mulf %16, %3 : vector<3x16x16xf32>
    %18 = vector.shape_cast %9 : vector<16x16xf32> to vector<1x16x16xf32>
    %19 = vector.broadcast %18 : vector<1x16x16xf32> to vector<3x16x16xf32>
    %20 = arith.mulf %19, %5 : vector<3x16x16xf32>
    %21 = arith.subf %17, %20 : vector<3x16x16xf32>
    %22 = vector.shape_cast %7 : vector<16x16xf32> to vector<1x16x16xf32>
    %23 = vector.broadcast %22 : vector<1x16x16xf32> to vector<3x16x16xf32>
    %24 = arith.mulf %23, %5 : vector<3x16x16xf32>
    %25 = vector.shape_cast %9 : vector<16x16xf32> to vector<1x16x16xf32>
    %26 = vector.broadcast %25 : vector<1x16x16xf32> to vector<3x16x16xf32>
    %27 = arith.mulf %26, %3 : vector<3x16x16xf32>
    %28 = arith.addf %24, %27 : vector<3x16x16xf32>
    %29 = vector.extract_strided_slice %21 {offsets = [0, 0, 0], sizes = [3, 8, 8], strides = [1, 1, 1]} : vector<3x16x16xf32> to vector<3x8x8xf32>
    %30 = vector.extract_strided_slice %21 {offsets = [0, 0, 8], sizes = [3, 8, 8], strides = [1, 1, 1]} : vector<3x16x16xf32> to vector<3x8x8xf32>
    %31 = arith.addf %29, %30 : vector<3x8x8xf32>
    %32 = vector.extract_strided_slice %21 {offsets = [0, 8, 0], sizes = [3, 8, 8], strides = [1, 1, 1]} : vector<3x16x16xf32> to vector<3x8x8xf32>
    %33 = arith.addf %31, %32 : vector<3x8x8xf32>
    %34 = vector.extract_strided_slice %21 {offsets = [0, 8, 8], sizes = [3, 8, 8], strides = [1, 1, 1]} : vector<3x16x16xf32> to vector<3x8x8xf32>
    %35 = arith.addf %33, %34 : vector<3x8x8xf32>
    %cst_15 = arith.constant 2.500000e-01 : f32
    %36 = vector.broadcast %cst_15 : f32 to vector<3x8x8xf32>
    %37 = arith.mulf %35, %36 : vector<3x8x8xf32>
    %38 = vector.extract_strided_slice %28 {offsets = [0, 0, 0], sizes = [3, 8, 8], strides = [1, 1, 1]} : vector<3x16x16xf32> to vector<3x8x8xf32>
    %39 = vector.extract_strided_slice %28 {offsets = [0, 0, 8], sizes = [3, 8, 8], strides = [1, 1, 1]} : vector<3x16x16xf32> to vector<3x8x8xf32>
    %40 = arith.addf %38, %39 : vector<3x8x8xf32>
    %41 = vector.extract_strided_slice %28 {offsets = [0, 8, 0], sizes = [3, 8, 8], strides = [1, 1, 1]} : vector<3x16x16xf32> to vector<3x8x8xf32>
    %42 = arith.addf %40, %41 : vector<3x8x8xf32>
    %43 = vector.extract_strided_slice %28 {offsets = [0, 8, 8], sizes = [3, 8, 8], strides = [1, 1, 1]} : vector<3x16x16xf32> to vector<3x8x8xf32>
    %44 = arith.addf %42, %43 : vector<3x8x8xf32>
    %cst_16 = arith.constant 2.500000e-01 : f32
    %45 = vector.broadcast %cst_16 : f32 to vector<3x8x8xf32>
    %46 = arith.mulf %44, %45 : vector<3x8x8xf32>
    %47 = vector.extract_strided_slice %14 {offsets = [0, 0], sizes = [8, 8], strides = [1, 1]} : vector<16x16xf32> to vector<8x8xf32>
    %48 = vector.extract_strided_slice %14 {offsets = [0, 8], sizes = [8, 8], strides = [1, 1]} : vector<16x16xf32> to vector<8x8xf32>
    %49 = arith.addf %47, %48 : vector<8x8xf32>
    %50 = vector.extract_strided_slice %14 {offsets = [8, 0], sizes = [8, 8], strides = [1, 1]} : vector<16x16xf32> to vector<8x8xf32>
    %51 = arith.addf %49, %50 : vector<8x8xf32>
    %52 = vector.extract_strided_slice %14 {offsets = [8, 8], sizes = [8, 8], strides = [1, 1]} : vector<16x16xf32> to vector<8x8xf32>
    %53 = arith.addf %51, %52 : vector<8x8xf32>
    %cst_17 = arith.constant 2.500000e-01 : f32
    %54 = vector.broadcast %cst_17 : f32 to vector<8x8xf32>
    %55 = arith.mulf %53, %54 : vector<8x8xf32>
    %56 = vector.broadcast %1 : f32 to vector<8x8xf32>
    %57 = arith.addf %55, %56 : vector<8x8xf32>
    %cst_18 = arith.constant 1.000000e+00 : f32
    %58 = vector.broadcast %cst_18 : f32 to vector<8x8xf32>
    %59 = arith.divf %58, %57 : vector<8x8xf32>
    %60 = vector.shape_cast %59 : vector<8x8xf32> to vector<1x8x8xf32>
    %61 = vector.broadcast %60 : vector<1x8x8xf32> to vector<3x8x8xf32>
    %62 = arith.mulf %37, %61 : vector<3x8x8xf32>
    %63 = vector.shape_cast %59 : vector<8x8xf32> to vector<1x8x8xf32>
    %64 = vector.broadcast %63 : vector<1x8x8xf32> to vector<3x8x8xf32>
    %65 = arith.mulf %46, %64 : vector<3x8x8xf32>
    %66 = tpu.concatenate %62, %62 in 2 : vector<3x8x8xf32>, vector<3x8x8xf32> -> vector<3x8x16xf32>
    %67 = tpu.concatenate %66, %66 in 1 : vector<3x8x16xf32>, vector<3x8x16xf32> -> vector<3x16x16xf32>
    %68 = tpu.concatenate %65, %65 in 2 : vector<3x8x8xf32>, vector<3x8x8xf32> -> vector<3x8x16xf32>
    %69 = tpu.concatenate %68, %68 in 1 : vector<3x8x16xf32>, vector<3x8x16xf32> -> vector<3x16x16xf32>
    %70 = vector.shape_cast %7 : vector<16x16xf32> to vector<1x16x16xf32>
    %71 = vector.broadcast %70 : vector<1x16x16xf32> to vector<3x16x16xf32>
    %72 = arith.mulf %71, %67 : vector<3x16x16xf32>
    %73 = vector.shape_cast %11 : vector<16x16xf32> to vector<1x16x16xf32>
    %74 = vector.broadcast %73 : vector<1x16x16xf32> to vector<3x16x16xf32>
    %75 = arith.mulf %74, %69 : vector<3x16x16xf32>
    %76 = arith.subf %72, %75 : vector<3x16x16xf32>
    %77 = vector.shape_cast %7 : vector<16x16xf32> to vector<1x16x16xf32>
    %78 = vector.broadcast %77 : vector<1x16x16xf32> to vector<3x16x16xf32>
    %79 = arith.mulf %78, %69 : vector<3x16x16xf32>
    %80 = vector.shape_cast %11 : vector<16x16xf32> to vector<1x16x16xf32>
    %81 = vector.broadcast %80 : vector<1x16x16xf32> to vector<3x16x16xf32>
    %82 = arith.mulf %81, %67 : vector<3x16x16xf32>
    %83 = arith.addf %79, %82 : vector<3x16x16xf32>
    %cst_19 = arith.constant 1.000000e+00 : f32
    %84 = arith.divf %cst_19, %1 : f32
    %85 = arith.subf %3, %76 : vector<3x16x16xf32>
    %86 = vector.broadcast %84 : f32 to vector<3x16x16xf32>
    %87 = arith.mulf %85, %86 : vector<3x16x16xf32>
    %c0_20 = arith.constant 0 : index
    %c0_21 = arith.constant 0 : index
    %c0_22 = arith.constant 0 : index
    %c0_23 = arith.constant 0 : index
    %88 = vector.load %arg6[%c0_20, %c0_21, %c0_22, %c0_23] : memref<1x3x16x16xf32, #tpu.memory_space<vmem>>, vector<1x3x16x16xf32>
    %89 = vector.shape_cast %88 : vector<1x3x16x16xf32> to vector<3x16x16xf32>
    %90 = vector.shape_cast %87 : vector<3x16x16xf32> to vector<1x3x16x16xf32>
    tpu.vector_store %arg6[%c0_20, %c0_21, %c0_22, %c0_23], %90 {strides = array<i32>} : memref<1x3x16x16xf32, #tpu.memory_space<vmem>>, vector<1x3x16x16xf32>,
    %91 = arith.subf %5, %83 : vector<3x16x16xf32>
    %92 = vector.broadcast %84 : f32 to vector<3x16x16xf32>
    %93 = arith.mulf %91, %92 : vector<3x16x16xf32>
    %c0_24 = arith.constant 0 : index
    %c0_25 = arith.constant 0 : index
    %c0_26 = arith.constant 0 : index
    %c0_27 = arith.constant 0 : index
    %94 = vector.load %arg7[%c0_24, %c0_25, %c0_26, %c0_27] : memref<1x3x16x16xf32, #tpu.memory_space<vmem>>, vector<1x3x16x16xf32>
    %95 = vector.shape_cast %94 : vector<1x3x16x16xf32> to vector<3x16x16xf32>
    %96 = vector.shape_cast %93 : vector<3x16x16xf32> to vector<1x3x16x16xf32>
    tpu.vector_store %arg7[%c0_24, %c0_25, %c0_26, %c0_27], %96 {strides = array<i32>} : memref<1x3x16x16xf32, #tpu.memory_space<vmem>>, vector<1x3x16x16xf32>,
    return
  }
  func.func @transform_0(%arg0: i32, %arg1: memref<2xf32, #tpu.memory_space<smem>>) -> (i32, i32, i32, i32) {
    %c0_i32 = arith.constant 0 : i32
    %c0_i32_0 = arith.constant 0 : i32
    %c0_i32_1 = arith.constant 0 : i32
    %c0_i32_2 = arith.constant 0 : i32
    return %arg0, %c0_i32, %c0_i32_0, %c0_i32_1 : i32, i32, i32, i32
  }
  func.func @transform_1(%arg0: i32, %arg1: memref<2xf32, #tpu.memory_space<smem>>) -> (i32, i32, i32, i32) {
    %c0_i32 = arith.constant 0 : i32
    %c0_i32_0 = arith.constant 0 : i32
    %c0_i32_1 = arith.constant 0 : i32
    %c0_i32_2 = arith.constant 0 : i32
    return %arg0, %c0_i32, %c0_i32_0, %c0_i32_1 : i32, i32, i32, i32
  }
  func.func @transform_2(%arg0: i32, %arg1: memref<2xf32, #tpu.memory_space<smem>>) -> (i32, i32, i32, i32) {
    %c0_i32 = arith.constant 0 : i32
    %c0_i32_0 = arith.constant 0 : i32
    %c0_i32_1 = arith.constant 0 : i32
    %c0_i32_2 = arith.constant 0 : i32
    %c0_i32_3 = arith.constant 0 : i32
    return %c0_i32, %c0_i32_0, %c0_i32_1, %c0_i32_2 : i32, i32, i32, i32
  }
  func.func @transform_3(%arg0: i32, %arg1: memref<2xf32, #tpu.memory_space<smem>>) -> (i32, i32, i32, i32) {
    %c0_i32 = arith.constant 0 : i32
    %c0_i32_0 = arith.constant 0 : i32
    %c0_i32_1 = arith.constant 0 : i32
    %c0_i32_2 = arith.constant 0 : i32
    %c0_i32_3 = arith.constant 0 : i32
    return %c0_i32, %c0_i32_0, %c0_i32_1, %c0_i32_2 : i32, i32, i32, i32
  }
  func.func @transform_4(%arg0: i32, %arg1: memref<2xf32, #tpu.memory_space<smem>>) -> (i32, i32, i32, i32) {
    %c0_i32 = arith.constant 0 : i32
    %c0_i32_0 = arith.constant 0 : i32
    %c0_i32_1 = arith.constant 0 : i32
    %c0_i32_2 = arith.constant 0 : i32
    return %arg0, %c0_i32, %c0_i32_0, %c0_i32_1 : i32, i32, i32, i32
  }
  func.func @transform_5(%arg0: i32, %arg1: memref<2xf32, #tpu.memory_space<smem>>) -> (i32, i32, i32, i32) {
    %c0_i32 = arith.constant 0 : i32
    %c0_i32_0 = arith.constant 0 : i32
    %c0_i32_1 = arith.constant 0 : i32
    %c0_i32_2 = arith.constant 0 : i32
    return %arg0, %c0_i32, %c0_i32_0, %c0_i32_1 : i32, i32, i32, i32
  }
}

module attributes {stable_mosaic.version = 11 : i64} {
  func.func @_scale_kernel(%arg0: i32, %arg1: memref<2xf32, #tpu.memory_space<smem>>, %arg2: memref<1x3x16x16xf32, #tpu.memory_space<vmem>>, %arg3: memref<1x1x16x16xf32, #tpu.memory_space<vmem>>, %arg4: memref<1x3x16x16xf32, #tpu.memory_space<vmem>>) attributes {dimension_semantics = [#tpu.dimension_semantics<parallel>], iteration_bounds = array<i64: 2>, scalar_prefetch = 1 : i64, scratch_operands = 0 : i64, tpu.core_type = #tpu.core_type<tc>, window_params = [{transform_indices = @transform_0, window_bounds = array<i64: 1, 3, 16, 16>}, {transform_indices = @transform_1, window_bounds = array<i64: 1, 1, 16, 16>}, {transform_indices = @transform_2, window_bounds = array<i64: 1, 3, 16, 16>}]} {
    %0 = arith.index_cast %arg0 : i32 to index
    %1 = memref.load %arg1[%0] : memref<2xf32, #tpu.memory_space<smem>>
    %c0 = arith.constant 0 : index
    %c0_0 = arith.constant 0 : index
    %c0_1 = arith.constant 0 : index
    %c0_2 = arith.constant 0 : index
    %2 = vector.load %arg2[%c0, %c0_0, %c0_1, %c0_2] : memref<1x3x16x16xf32, #tpu.memory_space<vmem>>, vector<1x3x16x16xf32>
    %3 = vector.shape_cast %2 : vector<1x3x16x16xf32> to vector<3x16x16xf32>
    %cst = arith.constant 1.000000e+00 : f32
    %4 = arith.addf %1, %cst : f32
    %5 = vector.broadcast %4 : f32 to vector<3x16x16xf32>
    %6 = arith.mulf %3, %5 : vector<3x16x16xf32>
    %c0_3 = arith.constant 0 : index
    %c0_4 = arith.constant 0 : index
    %c0_5 = arith.constant 0 : index
    %c0_6 = arith.constant 0 : index
    %7 = vector.load %arg3[%c0_3, %c0_4, %c0_5, %c0_6] : memref<1x1x16x16xf32, #tpu.memory_space<vmem>>, vector<1x1x16x16xf32>
    %8 = vector.shape_cast %7 : vector<1x1x16x16xf32> to vector<16x16xf32>
    %9 = vector.broadcast %1 : f32 to vector<16x16xf32>
    %10 = arith.addf %9, %8 : vector<16x16xf32>
    %11 = vector.shape_cast %10 : vector<16x16xf32> to vector<1x16x16xf32>
    %12 = vector.broadcast %11 : vector<1x16x16xf32> to vector<3x16x16xf32>
    %13 = arith.divf %6, %12 : vector<3x16x16xf32>
    %c0_7 = arith.constant 0 : index
    %c0_8 = arith.constant 0 : index
    %c0_9 = arith.constant 0 : index
    %c0_10 = arith.constant 0 : index
    %14 = vector.load %arg4[%c0_7, %c0_8, %c0_9, %c0_10] : memref<1x3x16x16xf32, #tpu.memory_space<vmem>>, vector<1x3x16x16xf32>
    %15 = vector.shape_cast %14 : vector<1x3x16x16xf32> to vector<3x16x16xf32>
    %16 = vector.shape_cast %13 : vector<3x16x16xf32> to vector<1x3x16x16xf32>
    tpu.vector_store %arg4[%c0_7, %c0_8, %c0_9, %c0_10], %16 {strides = array<i32>} : memref<1x3x16x16xf32, #tpu.memory_space<vmem>>, vector<1x3x16x16xf32>,
    return
  }
  func.func @transform_0(%arg0: i32, %arg1: memref<2xf32, #tpu.memory_space<smem>>) -> (i32, i32, i32, i32) {
    %c0_i32 = arith.constant 0 : i32
    %c0_i32_0 = arith.constant 0 : i32
    %c0_i32_1 = arith.constant 0 : i32
    %c0_i32_2 = arith.constant 0 : i32
    return %arg0, %c0_i32, %c0_i32_0, %c0_i32_1 : i32, i32, i32, i32
  }
  func.func @transform_1(%arg0: i32, %arg1: memref<2xf32, #tpu.memory_space<smem>>) -> (i32, i32, i32, i32) {
    %c0_i32 = arith.constant 0 : i32
    %c0_i32_0 = arith.constant 0 : i32
    %c0_i32_1 = arith.constant 0 : i32
    %c0_i32_2 = arith.constant 0 : i32
    return %arg0, %c0_i32, %c0_i32_0, %c0_i32_1 : i32, i32, i32, i32
  }
  func.func @transform_2(%arg0: i32, %arg1: memref<2xf32, #tpu.memory_space<smem>>) -> (i32, i32, i32, i32) {
    %c0_i32 = arith.constant 0 : i32
    %c0_i32_0 = arith.constant 0 : i32
    %c0_i32_1 = arith.constant 0 : i32
    %c0_i32_2 = arith.constant 0 : i32
    return %arg0, %c0_i32, %c0_i32_0, %c0_i32_1 : i32, i32, i32, i32
  }
}

module attributes {stable_mosaic.version = 11 : i64} {
  func.func @_scale_kernel(%arg0: i32, %arg1: memref<2xf32, #tpu.memory_space<smem>>, %arg2: memref<1x3x16x16xf32, #tpu.memory_space<vmem>>, %arg3: memref<1x1x16x16xf32, #tpu.memory_space<vmem>>, %arg4: memref<1x3x16x16xf32, #tpu.memory_space<vmem>>) attributes {dimension_semantics = [#tpu.dimension_semantics<parallel>], iteration_bounds = array<i64: 2>, scalar_prefetch = 1 : i64, scratch_operands = 0 : i64, tpu.core_type = #tpu.core_type<tc>, window_params = [{transform_indices = @transform_0, window_bounds = array<i64: 1, 3, 16, 16>}, {transform_indices = @transform_1, window_bounds = array<i64: 1, 1, 16, 16>}, {transform_indices = @transform_2, window_bounds = array<i64: 1, 3, 16, 16>}]} {
    %0 = arith.index_cast %arg0 : i32 to index
    %1 = memref.load %arg1[%0] : memref<2xf32, #tpu.memory_space<smem>>
    %c0 = arith.constant 0 : index
    %c0_0 = arith.constant 0 : index
    %c0_1 = arith.constant 0 : index
    %c0_2 = arith.constant 0 : index
    %2 = vector.load %arg2[%c0, %c0_0, %c0_1, %c0_2] : memref<1x3x16x16xf32, #tpu.memory_space<vmem>>, vector<1x3x16x16xf32>
    %3 = vector.shape_cast %2 : vector<1x3x16x16xf32> to vector<3x16x16xf32>
    %cst = arith.constant 1.000000e+00 : f32
    %4 = arith.addf %1, %cst : f32
    %5 = vector.broadcast %4 : f32 to vector<3x16x16xf32>
    %6 = arith.mulf %3, %5 : vector<3x16x16xf32>
    %c0_3 = arith.constant 0 : index
    %c0_4 = arith.constant 0 : index
    %c0_5 = arith.constant 0 : index
    %c0_6 = arith.constant 0 : index
    %7 = vector.load %arg3[%c0_3, %c0_4, %c0_5, %c0_6] : memref<1x1x16x16xf32, #tpu.memory_space<vmem>>, vector<1x1x16x16xf32>
    %8 = vector.shape_cast %7 : vector<1x1x16x16xf32> to vector<16x16xf32>
    %9 = vector.broadcast %1 : f32 to vector<16x16xf32>
    %10 = arith.addf %9, %8 : vector<16x16xf32>
    %11 = vector.shape_cast %10 : vector<16x16xf32> to vector<1x16x16xf32>
    %12 = vector.broadcast %11 : vector<1x16x16xf32> to vector<3x16x16xf32>
    %13 = arith.divf %6, %12 : vector<3x16x16xf32>
    %c0_7 = arith.constant 0 : index
    %c0_8 = arith.constant 0 : index
    %c0_9 = arith.constant 0 : index
    %c0_10 = arith.constant 0 : index
    %14 = vector.load %arg4[%c0_7, %c0_8, %c0_9, %c0_10] : memref<1x3x16x16xf32, #tpu.memory_space<vmem>>, vector<1x3x16x16xf32>
    %15 = vector.shape_cast %14 : vector<1x3x16x16xf32> to vector<3x16x16xf32>
    %16 = vector.shape_cast %13 : vector<3x16x16xf32> to vector<1x3x16x16xf32>
    tpu.vector_store %arg4[%c0_7, %c0_8, %c0_9, %c0_10], %16 {strides = array<i32>} : memref<1x3x16x16xf32, #tpu.memory_space<vmem>>, vector<1x3x16x16xf32>,
    return
  }
  func.func @transform_0(%arg0: i32, %arg1: memref<2xf32, #tpu.memory_space<smem>>) -> (i32, i32, i32, i32) {
    %c0_i32 = arith.constant 0 : i32
    %c0_i32_0 = arith.constant 0 : i32
    %c0_i32_1 = arith.constant 0 : i32
    %c0_i32_2 = arith.constant 0 : i32
    return %arg0, %c0_i32, %c0_i32_0, %c0_i32_1 : i32, i32, i32, i32
  }
  func.func @transform_1(%arg0: i32, %arg1: memref<2xf32, #tpu.memory_space<smem>>) -> (i32, i32, i32, i32) {
    %c0_i32 = arith.constant 0 : i32
    %c0_i32_0 = arith.constant 0 : i32
    %c0_i32_1 = arith.constant 0 : i32
    %c0_i32_2 = arith.constant 0 : i32
    return %arg0, %c0_i32, %c0_i32_0, %c0_i32_1 : i32, i32, i32, i32
  }
  func.func @transform_2(%arg0: i32, %arg1: memref<2xf32, #tpu.memory_space<smem>>) -> (i32, i32, i32, i32) {
    %c0_i32 = arith.constant 0 : i32
    %c0_i32_0 = arith.constant 0 : i32
    %c0_i32_1 = arith.constant 0 : i32
    %c0_i32_2 = arith.constant 0 : i32
    return %arg0, %c0_i32, %c0_i32_0, %c0_i32_1 : i32, i32, i32, i32
  }
}

</mosaic_0001>

<llo_original>
// kernel: defaultnet_forward.7
$region0: #{defaultnet_forward.7}
  #allocation0 [shape = 'u32[]', space=smem, size = 0x4, offset = 0x4, fixed_abs, tag = 'smem constant byte address 0x4 - core index']
  #allocation1 [shape = 'u32[144,128]{1,0:T(1,128)}', space=vmem, size = 0x12000, scoped, tag = 'internal scratch']
  %s0 = inlined_call_operand.vmem [shape: f32[2,2], index: 0, kind: input, shape index: {}]
  %s1 = inlined_call_operand.vmem [shape: f32[2,64], index: 1, kind: input, shape index: {}]
  %s2 = inlined_call_operand.vmem [shape: f32[1,64], index: 2, kind: input, shape index: {}]
  %s3 = inlined_call_operand.vmem [shape: f32[64,64], index: 3, kind: input, shape index: {}]
  %s4 = inlined_call_operand.vmem [shape: f32[1,64], index: 4, kind: input, shape index: {}]
  %s5 = inlined_call_operand.vmem [shape: f32[64,6], index: 5, kind: input, shape index: {}]
  %s6 = inlined_call_operand.vmem [shape: f32[1,6], index: 6, kind: input, shape index: {}]
  %s7 = inlined_call_operand.vmem [shape: f32[2,6], index: 7, kind: output, shape index: {}]
  %s8 = sld [smem:[#allocation0]]
  $region38: #{defaultnet_forward.7} parent=0
    _
  %s10 = ssub.s32 1, %s8
  %s11 = scalar_select 0, %s10, %s8
  // Predicated region
  $region2: #{defaultnet_forward.7} parent=0 // pred_check
    _
  $region3: #{defaultnet_forward.7} parent=0 // pred_check_branch
    %13 = sbr.rel (0) target = $region5
  $region4: #{defaultnet_forward.7} parent=0 // pred_region
    _
  $region5: #{defaultnet_forward.7} parent=0 // pred_fallthru
    _
  // Predicated region
  $region6: #{defaultnet_forward.7} parent=0 // pred_check
    _
  $region7: #{defaultnet_forward.7} parent=0 // pred_check_branch
    %15 = sbr.rel (0) target = $region9
  $region8: #{defaultnet_forward.7} parent=0 // pred_region
    _
  $region9: #{defaultnet_forward.7} parent=0 // pred_fallthru
    _
  // Predicated region
  $region10: #{defaultnet_forward.7} parent=0 // pred_check
    _
  $region11: #{defaultnet_forward.7} parent=0 // pred_check_branch
    %17 = sbr.rel (0) target = $region13
  $region12: #{defaultnet_forward.7} parent=0 // pred_region
    _
  $region13: #{defaultnet_forward.7} parent=0 // pred_fallthru
    _
  // Predicated region
  $region14: #{defaultnet_forward.7} parent=0 // pred_check
    _
  $region15: #{defaultnet_forward.7} parent=0 // pred_check_branch
    %19 = sbr.rel (0) target = $region17
  $region16: #{defaultnet_forward.7} parent=0 // pred_region
    _
  $region17: #{defaultnet_forward.7} parent=0 // pred_fallthru
    _
  // Predicated region
  $region18: #{defaultnet_forward.7} parent=0 // pred_check
    _
  $region19: #{defaultnet_forward.7} parent=0 // pred_check_branch
    %21 = sbr.rel (0) target = $region21
  $region20: #{defaultnet_forward.7} parent=0 // pred_region
    _
  $region21: #{defaultnet_forward.7} parent=0 // pred_fallthru
    _
  // Predicated region
  $region22: #{defaultnet_forward.7} parent=0 // pred_check
    _
  $region23: #{defaultnet_forward.7} parent=0 // pred_check_branch
    %23 = sbr.rel (0) target = $region25
  $region24: #{defaultnet_forward.7} parent=0 // pred_region
    _
  $region25: #{defaultnet_forward.7} parent=0 // pred_fallthru
    _
  // Predicated region
  $region26: #{defaultnet_forward.7} parent=0 // pred_check
    _
  $region27: #{defaultnet_forward.7} parent=0 // pred_check_branch
    %25 = sbr.rel (0) target = $region29
  $region28: #{defaultnet_forward.7} parent=0 // pred_region
    _
  $region29: #{defaultnet_forward.7} parent=0 // pred_fallthru
    _
  %v26 = vld [vmem:[%s0] sm:$0x3]
  %v27 = vld [vmem:[%s1] sm:$0x3]
  %v28 = vld [vmem:[%s2] sm:$0x1]
  %v30 = vlaneseq
  %v31 = vshrl.u32 %v30, 7
  %v32 = vsub.s32 0, %v31
  %v33 = vrot.slane %v28, %v32
  %vm35 = vcmask 15360
  %v37 = vsel %vm35, %v26, 0
  %vm39 = vcmask 1041408
  %v41 = vsel %vm39, %v27, 0
  %43 = vmatprep.subr.mxu0 0.0
  %44 = vmatpush1.msra.mxu0 %v41
  %45 = vmatprep.subr.mxu0 0.0
  %46 = vmatpush1.msra.mxu0 0.0
  %47 = vmatprep.subr.mxu0 0.0
  %48 = vmatpush1.msra.mxu0 0.0
  %49 = vmatprep.subr.mxu0 0.0
  %50 = vmatpush1.msra.mxu0 0.0
  %51 = vmatprep.subr.mxu0 0.0
  %52 = vmatpush1.msra.mxu0 0.0
  %53 = vmatprep.subr.mxu0 0.0
  %54 = vmatpush1.msra.mxu0 0.0
  %55 = vmatprep.subr.mxu0 0.0
  %56 = vmatpush1.msra.mxu0 0.0
  %57 = vmatprep.subr.mxu0 0.0
  %58 = vmatpush1.msra.mxu0 0.0
  %59 = vmatprep.subr.mxu0 0.0
  %60 = vmatpush1.msra.mxu0 0.0
  %61 = vmatprep.subr.mxu0 0.0
  %62 = vmatpush1.msra.mxu0 0.0
  %63 = vmatprep.subr.mxu0 0.0
  %64 = vmatpush1.msra.mxu0 0.0
  %65 = vmatprep.subr.mxu0 0.0
  %66 = vmatpush1.msra.mxu0 0.0
  %67 = vmatprep.subr.mxu0 0.0
  %68 = vmatpush1.msra.mxu0 0.0
  %69 = vmatprep.subr.mxu0 0.0
  %70 = vmatpush1.msra.mxu0 0.0
  %71 = vmatprep.subr.mxu0 0.0
  %72 = vmatpush1.msra.mxu0 0.0
  %73 = vmatprep.subr.mxu0 0.0
  %74 = vmatpush1.msra.mxu0 0.0
  %75 = vmatprep.subr.mxu0 0.0
  %76 = vmatpush1.msra.mxu0 0.0
  %77 = vmatprep.subr.mxu0 0.0
  %78 = vmatpush1.msra.mxu0 0.0
  %79 = vmatprep.subr.mxu0 0.0
  %80 = vmatpush1.msra.mxu0 0.0
  %81 = vmatprep.subr.mxu0 0.0
  %82 = vmatpush1.msra.mxu0 0.0
  %83 = vmatprep.subr.mxu0 0.0
  %84 = vmatpush1.msra.mxu0 0.0
  %85 = vmatprep.subr.mxu0 0.0
  %86 = vmatpush1.msra.mxu0 0.0
  %87 = vmatprep.subr.mxu0 0.0
  %88 = vmatpush1.msra.mxu0 0.0
  %89 = vmatprep.subr.mxu0 0.0
  %90 = vmatpush1.msra.mxu0 0.0
  %91 = vmatprep.subr.mxu0 0.0
  %92 = vmatpush1.msra.mxu0 0.0
  %93 = vmatprep.subr.mxu0 0.0
  %94 = vmatpush1.msra.mxu0 0.0
  %95 = vmatprep.subr.mxu0 0.0
  %96 = vmatpush1.msra.mxu0 0.0
  %97 = vmatprep.subr.mxu0 0.0
  %98 = vmatpush1.msra.mxu0 0.0
  %99 = vmatprep.subr.mxu0 0.0
  %100 = vmatpush1.msra.mxu0 0.0
  %101 = vmatprep.subr.mxu0 0.0
  %102 = vmatpush1.msra.mxu0 0.0
  %103 = vmatprep.subr.mxu0 0.0
  %104 = vmatpush1.msra.mxu0 0.0
  %105 = vmatprep.subr.mxu0 0.0
  %106 = vmatpush1.msra.mxu0 0.0
  %107 = vmatprep.mubr.f32.mxu0 0.0
  %108 = vmatmul.mubr.f32.gmra.mrb[0].mxu0 %v37
  %v109 = vpop.f32.mrb[0].mxu0
  %v110 = vadd.f32 %v33, %v109
  %v111 = vpop.f32.mrb[0].mxu0
  %112 = vdwg.mxu0
  %v113 = vmax.f32 %v110, 0.0
  %v114 = vld [vmem:[%s3] sm:$0xff]
  %v115 = vld [vmem:[%s3 + $0x8] sm:$0xff]
  %v116 = vld [vmem:[%s3 + $0x10] sm:$0xff]
  %v117 = vld [vmem:[%s3 + $0x18] sm:$0xff]
  %v118 = vld [vmem:[%s3 + $0x20] sm:$0xff]
  %v119 = vld [vmem:[%s3 + $0x28] sm:$0xff]
  %v120 = vld [vmem:[%s3 + $0x30] sm:$0xff]
  %v121 = vld [vmem:[%s3 + $0x38] sm:$0xff]
  %v122 = vld [vmem:[%s4] sm:$0x1]
  %v124 = vlaneseq
  %v125 = vshrl.u32 %v124, 7
  %v126 = vsub.s32 0, %v125
  %v127 = vrot.slane %v122, %v126
  %vm129 = vcmask 523264
  %v131 = vsel %vm129, %v113, 0
  %133 = vmatprep.subr.mxu0 0.0
  %134 = vmatpush1.msra.mxu0 %v114
  %135 = vmatprep.subr.mxu0 0.0
  %136 = vmatpush1.msra.mxu0 %v115
  %137 = vmatprep.subr.mxu0 0.0
  %138 = vmatpush1.msra.mxu0 %v116
  %139 = vmatprep.subr.mxu0 0.0
  %140 = vmatpush1.msra.mxu0 %v117
  %141 = vmatprep.subr.mxu0 0.0
  %142 = vmatpush1.msra.mxu0 %v118
  %143 = vmatprep.subr.mxu0 0.0
  %144 = vmatpush1.msra.mxu0 %v119
  %145 = vmatprep.subr.mxu0 0.0
  %146 = vmatpush1.msra.mxu0 %v120
  %147 = vmatprep.subr.mxu0 0.0
  %148 = vmatpush1.msra.mxu0 %v121
  %149 = vmatprep.subr.mxu0 0.0
  %150 = vmatpush1.msra.mxu0 0.0
  %151 = vmatprep.subr.mxu0 0.0
  %152 = vmatpush1.msra.mxu0 0.0
  %153 = vmatprep.subr.mxu0 0.0
  %154 = vmatpush1.msra.mxu0 0.0
  %155 = vmatprep.subr.mxu0 0.0
  %156 = vmatpush1.msra.mxu0 0.0
  %157 = vmatprep.subr.mxu0 0.0
  %158 = vmatpush1.msra.mxu0 0.0
  %159 = vmatprep.subr.mxu0 0.0
  %160 = vmatpush1.msra.mxu0 0.0
  %161 = vmatprep.subr.mxu0 0.0
  %162 = vmatpush1.msra.mxu0 0.0
  %163 = vmatprep.subr.mxu0 0.0
  %164 = vmatpush1.msra.mxu0 0.0
  %165 = vmatprep.subr.mxu0 0.0
  %166 = vmatpush1.msra.mxu0 0.0
  %167 = vmatprep.subr.mxu0 0.0
  %168 = vmatpush1.msra.mxu0 0.0
  %169 = vmatprep.subr.mxu0 0.0
  %170 = vmatpush1.msra.mxu0 0.0
  %171 = vmatprep.subr.mxu0 0.0
  %172 = vmatpush1.msra.mxu0 0.0
  %173 = vmatprep.subr.mxu0 0.0
  %174 = vmatpush1.msra.mxu0 0.0
  %175 = vmatprep.subr.mxu0 0.0
  %176 = vmatpush1.msra.mxu0 0.0
  %177 = vmatprep.subr.mxu0 0.0
  %178 = vmatpush1.msra.mxu0 0.0
  %179 = vmatprep.subr.mxu0 0.0
  %180 = vmatpush1.msra.mxu0 0.0
  %181 = vmatprep.subr.mxu0 0.0
  %182 = vmatpush1.msra.mxu0 0.0
  %183 = vmatprep.subr.mxu0 0.0
  %184 = vmatpush1.msra.mxu0 0.0
  %185 = vmatprep.subr.mxu0 0.0
  %186 = vmatpush1.msra.mxu0 0.0
  %187 = vmatprep.subr.mxu0 0.0
  %188 = vmatpush1.msra.mxu0 0.0
  %189 = vmatprep.subr.mxu0 0.0
  %190 = vmatpush1.msra.mxu0 0.0
  %191 = vmatprep.subr.mxu0 0.0
  %192 = vmatpush1.msra.mxu0 0.0
  %193 = vmatprep.subr.mxu0 0.0
  %194 = vmatpush1.msra.mxu0 0.0
  %195 = vmatprep.subr.mxu0 0.0
  %196 = vmatpush1.msra.mxu0 0.0
  %197 = vmatprep.mubr.f32.mxu0 0.0
  %198 = vmatmul.mubr.f32.gmra.mrb[0].mxu0 %v131
  %v199 = vpop.f32.mrb[0].mxu0
  %v200 = vadd.f32 %v127, %v199
  %v201 = vpop.f32.mrb[0].mxu0
  %202 = vdwg.mxu0
  %v203 = vmax.f32 %v200, 0.0
  %v204 = vld [vmem:[%s5] sm:$0xff]
  %v205 = vld [vmem:[%s5 + $0x8] sm:$0xff]
  %v206 = vld [vmem:[%s5 + $0x10] sm:$0xff]
  %v207 = vld [vmem:[%s5 + $0x18] sm:$0xff]
  %v208 = vld [vmem:[%s5 + $0x20] sm:$0xff]
  %v209 = vld [vmem:[%s5 + $0x28] sm:$0xff]
  %v210 = vld [vmem:[%s5 + $0x30] sm:$0xff]
  %v211 = vld [vmem:[%s5 + $0x38] sm:$0xff]
  %v212 = vld [vmem:[%s6] sm:$0x1]
  %v214 = vlaneseq
  %v215 = vshrl.u32 %v214, 7
  %v216 = vsub.s32 0, %v215
  %v217 = vrot.slane %v212, %v216
  %v220 = vsel %vm129, %v203, 0
  %222 = vmatprep.subr.mxu0 0.0
  %223 = vmatpush1.msra.mxu0 %v204
  %224 = vmatprep.subr.mxu0 0.0
  %225 = vmatpush1.msra.mxu0 %v205
  %226 = vmatprep.subr.mxu0 0.0
  %227 = vmatpush1.msra.mxu0 %v206
  %228 = vmatprep.subr.mxu0 0.0
  %229 = vmatpush1.msra.mxu0 %v207
  %230 = vmatprep.subr.mxu0 0.0
  %231 = vmatpush1.msra.mxu0 %v208
  %232 = vmatprep.subr.mxu0 0.0
  %233 = vmatpush1.msra.mxu0 %v209
  %234 = vmatprep.subr.mxu0 0.0
  %235 = vmatpush1.msra.mxu0 %v210
  %236 = vmatprep.subr.mxu0 0.0
  %237 = vmatpush1.msra.mxu0 %v211
  %238 = vmatprep.subr.mxu0 0.0
  %239 = vmatpush1.msra.mxu0 0.0
  %240 = vmatprep.subr.mxu0 0.0
  %241 = vmatpush1.msra.mxu0 0.0
  %242 = vmatprep.subr.mxu0 0.0
  %243 = vmatpush1.msra.mxu0 0.0
  %244 = vmatprep.subr.mxu0 0.0
  %245 = vmatpush1.msra.mxu0 0.0
  %246 = vmatprep.subr.mxu0 0.0
  %247 = vmatpush1.msra.mxu0 0.0
  %248 = vmatprep.subr.mxu0 0.0
  %249 = vmatpush1.msra.mxu0 0.0
  %250 = vmatprep.subr.mxu0 0.0
  %251 = vmatpush1.msra.mxu0 0.0
  %252 = vmatprep.subr.mxu0 0.0
  %253 = vmatpush1.msra.mxu0 0.0
  %254 = vmatprep.subr.mxu0 0.0
  %255 = vmatpush1.msra.mxu0 0.0
  %256 = vmatprep.subr.mxu0 0.0
  %257 = vmatpush1.msra.mxu0 0.0
  %258 = vmatprep.subr.mxu0 0.0
  %259 = vmatpush1.msra.mxu0 0.0
  %260 = vmatprep.subr.mxu0 0.0
  %261 = vmatpush1.msra.mxu0 0.0
  %262 = vmatprep.subr.mxu0 0.0
  %263 = vmatpush1.msra.mxu0 0.0
  %264 = vmatprep.subr.mxu0 0.0
  %265 = vmatpush1.msra.mxu0 0.0
  %266 = vmatprep.subr.mxu0 0.0
  %267 = vmatpush1.msra.mxu0 0.0
  %268 = vmatprep.subr.mxu0 0.0
  %269 = vmatpush1.msra.mxu0 0.0
  %270 = vmatprep.subr.mxu0 0.0
  %271 = vmatpush1.msra.mxu0 0.0
  %272 = vmatprep.subr.mxu0 0.0
  %273 = vmatpush1.msra.mxu0 0.0
  %274 = vmatprep.subr.mxu0 0.0
  %275 = vmatpush1.msra.mxu0 0.0
  %276 = vmatprep.subr.mxu0 0.0
  %277 = vmatpush1.msra.mxu0 0.0
  %278 = vmatprep.subr.mxu0 0.0
  %279 = vmatpush1.msra.mxu0 0.0
  %280 = vmatprep.subr.mxu0 0.0
  %281 = vmatpush1.msra.mxu0 0.0
  %282 = vmatprep.subr.mxu0 0.0
  %283 = vmatpush1.msra.mxu0 0.0
  %284 = vmatprep.subr.mxu0 0.0
  %285 = vmatpush1.msra.mxu0 0.0
  %286 = vmatprep.mubr.f32.mxu0 0.0
  %287 = vmatmul.mubr.f32.gmra.mrb[0].mxu0 %v220
  %v288 = vpop.f32.mrb[0].mxu0
  %v289 = vadd.f32 %v217, %v288
  %v290 = vpop.f32.mrb[0].mxu0
  %291 = vdwg.mxu0
  %v292 = vmax.f32 %v289, 0.0
  %v293 = vand.u32 2147483647, %v289
  %v294 = vsub.f32 0.0, %v293
  %v295 = vmul.f32 %v294, 1.442695
  %v296 = vpow.pop %v295
  %v297 = vadd.f32 %v296, 1.0
  %v298 = vlog2.pop %v297
  %v299 = vmul.f32 %v298, 0.6931472
  %v300 = vadd.f32 %v292, %v299
  %vm301 = vcmask 41984
  %302 = vst.msk [vmem:[%s7] sm:$0x3] %vm301, %v300
  // Predicated region
  $region30: #{defaultnet_forward.7} parent=0 // pred_check
    _
  $region31: #{defaultnet_forward.7} parent=0 // pred_check_branch
    %304 = sbr.rel (0) target = $region33
  $region32: #{defaultnet_forward.7} parent=0 // pred_region
    _
  $region33: #{defaultnet_forward.7} parent=0 // pred_fallthru
    _
  // Predicated region
  $region34: #{defaultnet_forward.7} parent=0 // pred_check
    _
  $region35: #{defaultnet_forward.7} parent=0 // pred_check_branch
    %306 = sbr.rel (0) target = $region37
  $region36: #{defaultnet_forward.7} parent=0 // pred_region
    _
  $region37: #{defaultnet_forward.7} parent=0 // pred_fallthru
    _

// kernel: defaultnet_forward.8
$region0: #{defaultnet_forward.8}
  #allocation0 [shape = 'u32[]', space=smem, size = 0x4, offset = 0x4, fixed_abs, tag = 'smem constant byte address 0x4 - core index']
  #allocation1 [shape = 'u32[144,128]{1,0:T(1,128)}', space=vmem, size = 0x12000, scoped, tag = 'internal scratch']
  #allocation2 [shape = 's32[1]{0}', space=sflag, size = 0x4, scoped, tag = 'scoped memory for defaultnet_forward.8']
  #allocation3 [shape = 'u8[512]{0}', space=smem, size = 0x200, scoped, tag = 'prefetched SMEM operand 0']
  %s0 = inlined_call_operand.vmem [shape: f32[2], index: 0, kind: input, shape index: {}]
  %s1 = inlined_call_operand.vmem [shape: f32[2,3,16,16], index: 1, kind: input, shape index: {}]
  %s2 = inlined_call_operand.vmem [shape: f32[2,3,16,16], index: 2, kind: input, shape index: {}]
  %s3 = inlined_call_operand.vmem [shape: f32[1,1,16,16], index: 3, kind: input, shape index: {}]
  %s4 = inlined_call_operand.vmem [shape: f32[1,1,16,16], index: 4, kind: input, shape index: {}]
  %s5 = inlined_call_operand.vmem [shape: f32[2,3,16,16], index: 5, kind: output, shape index: {0}]
  %s6 = inlined_call_operand.vmem [shape: f32[2,3,16,16], index: 6, kind: output, shape index: {1}]
  %7 = xla_tuple %s5, %s6
  %s8 = sld [smem:[#allocation0]]
  $region57: #{defaultnet_forward.8} parent=0
    _
  %s10 = ssub.s32 1, %s8
  %s11 = scalar_select 0, %s10, %s8
  %s12 = sshll.u32 %s0, 4
  %s13 = int_to_ptr.vmem [resolvable:$true] %s12
  %15 = dma.vmem_to_smem %s13, 16, [#allocation3], [#allocation2]
  %16 = dma.done [#allocation2], 16
  %17 = sfence
  loop: start=0, step=1, limit=4
  $region2: #{defaultnet_forward.8} parent=0 // loop_pre_header
    _
  $region3: #{defaultnet_forward.8} parent=0 // loop_header
    %s19 = sphi 0, %s23
    %p20 = scmp.ge.s32.totalorder %s19, 4
    %s29 = sphi 0, %s31
    %s32 = sphi 0, %s29
    %s33 = sphi 0, %s32
    %s49 = sphi 0, %s33
    %s55 = sphi 0, %s57
    %s58 = sphi 0, %s55
    %s59 = sphi 0, %s58
    %s75 = sphi 0, %s59
    %s79 = sphi 0, %s79
    %s81 = sphi 0, %s79
    %s82 = sphi 0, %s81
    %s96 = sphi 0, %s82
    %s100 = sphi 0, %s100
    %s102 = sphi 0, %s100
    %s103 = sphi 0, %s102
    %s117 = sphi 0, %s103
    %s123 = sphi 0, %s125
    %s126 = sphi 0, %s123
    %s127 = sphi 0, %s126
    %s143 = sphi 0, %s127
    %s149 = sphi 0, %s151
    %s152 = sphi 0, %s149
    %s153 = sphi 0, %s152
    %s169 = sphi 0, %s153
  $region4: #{defaultnet_forward.8} parent=0 // loop_header_branch
    %22 = sbr.rel (%p20) target = $region8
  $region5: #{defaultnet_forward.8} parent=0 // loop_body
    %s24 = ssub.s32 %s19, 1
    %s25 = ssub.s32 %s19, 2
    %s26 = sadd.s32 %s19, 1
    %s27 = ssub.s32 %s19, %s26
    %p28 = scmp.eq.s32.totalorder %s27, 0
    %s30 = sadd.s32 %s29, 1
    %s31 = scalar_select %p28, %s29, %s30
    %p34 = pneg %p28
    %p35 = scmp.eq.s32.totalorder %s19, 1
    %p36 = por %p34, %p35
    %p37 = scmp.ne.s32.totalorder %s29, %s32
    %p38 = scmp.eq.s32.totalorder %s19, 0
    %p39 = por %p37, %p38
    %p40 = scmp.ne.s32.totalorder %s29, %s32
    %p41 = scmp.eq.s32.totalorder %s24, 1
    %p42 = por %p40, %p41
    %p43 = scmp.ne.s32.totalorder %s32, %s33
    %p44 = scmp.eq.s32.totalorder %s24, 0
    %p45 = por %p43, %p44
    %p46 = scmp.ne.s32.totalorder %s32, %s33
    %p47 = scmp.eq.s32.totalorder %s25, 1
    %p48 = por %p46, %p47
    %p50 = scmp.ne.s32.totalorder %s33, %s49
    %p51 = scmp.eq.s32.totalorder %s25, 0
    %p52 = por %p50, %p51
    %s53 = ssub.s32 %s19, %s26
    %p54 = scmp.eq.s32.totalorder %s53, 0
    %s56 = sadd.s32 %s55, 1
    %s57 = scalar_select %p54, %s55, %s56
    %p60 = pneg %p54
    %p61 = scmp.eq.s32.totalorder %s19, 1
    %p62 = por %p60, %p61
    %p63 = scmp.ne.s32.totalorder %s55, %s58
    %p64 = scmp.eq.s32.totalorder %s19, 0
    %p65 = por %p63, %p64
    %p66 = scmp.ne.s32.totalorder %s55, %s58
    %p67 = scmp.eq.s32.totalorder %s24, 1
    %p68 = por %p66, %p67
    %p69 = scmp.ne.s32.totalorder %s58, %s59
    %p70 = scmp.eq.s32.totalorder %s24, 0
    %p71 = por %p69, %p70
    %p72 = scmp.ne.s32.totalorder %s58, %s59
    %p73 = scmp.eq.s32.totalorder %s25, 1
    %p74 = por %p72, %p73
    %p76 = scmp.ne.s32.totalorder %s59, %s75
    %p77 = scmp.eq.s32.totalorder %s25, 0
    %p78 = por %p76, %p77
    %s80 = sadd.s32 %s79, 1
    %p83 = scmp.eq.s32.totalorder %s19, 1
    %p84 = scmp.ne.s32.totalorder %s79, %s81
    %p85 = scmp.eq.s32.totalorder %s19, 0
    %p86 = por %p84, %p85
    %p87 = scmp.ne.s32.totalorder %s79, %s81
    %p88 = scmp.eq.s32.totalorder %s24, 1
    %p89 = por %p87, %p88
    %p90 = scmp.ne.s32.totalorder %s81, %s82
    %p91 = scmp.eq.s32.totalorder %s24, 0
    %p92 = por %p90, %p91
    %p93 = scmp.ne.s32.totalorder %s81, %s82
    %p94 = scmp.eq.s32.totalorder %s25, 1
    %p95 = por %p93, %p94
    %p97 = scmp.ne.s32.totalorder %s82, %s96
    %p98 = scmp.eq.s32.totalorder %s25, 0
    %p99 = por %p97, %p98
    %s101 = sadd.s32 %s100, 1
    %p104 = scmp.eq.s32.totalorder %s19, 1
    %p105 = scmp.ne.s32.totalorder %s100, %s102
    %p106 = scmp.eq.s32.totalorder %s19, 0
    %p107 = por %p105, %p106
    %p108 = scmp.ne.s32.totalorder %s100, %s102
    %p109 = scmp.eq.s32.totalorder %s24, 1
    %p110 = por %p108, %p109
    %p111 = scmp.ne.s32.totalorder %s102, %s103
    %p112 = scmp.eq.s32.totalorder %s24, 0
    %p113 = por %p111, %p112
    %p114 = scmp.ne.s32.totalorder %s102, %s103
    %p115 = scmp.eq.s32.totalorder %s25, 1
    %p116 = por %p114, %p115
    %p118 = scmp.ne.s32.totalorder %s103, %s117
    %p119 = scmp.eq.s32.totalorder %s25, 0
    %p120 = por %p118, %p119
    %s121 = ssub.s32 %s19, %s26
    %p122 = scmp.eq.s32.totalorder %s121, 0
    %s124 = sadd.s32 %s123, 1
    %s125 = scalar_select %p122, %s123, %s124
    %p128 = pneg %p122
    %p129 = scmp.eq.s32.totalorder %s19, 1
    %p130 = por %p128, %p129
    %p131 = scmp.ne.s32.totalorder %s123, %s126
    %p132 = scmp.eq.s32.totalorder %s19, 0
    %p133 = por %p131, %p132
    %p134 = scmp.ne.s32.totalorder %s123, %s126
    %p135 = scmp.eq.s32.totalorder %s24, 1
    %p136 = por %p134, %p135
    %p137 = scmp.ne.s32.totalorder %s126, %s127
    %p138 = scmp.eq.s32.totalorder %s24, 0
    %p139 = por %p137, %p138
    %p140 = scmp.ne.s32.totalorder %s126, %s127
    %p141 = scmp.eq.s32.totalorder %s25, 1
    %p142 = por %p140, %p141
    %p144 = scmp.ne.s32.totalorder %s127, %s143
    %p145 = scmp.eq.s32.totalorder %s25, 0
    %p146 = por %p144, %p145
    %s147 = ssub.s32 %s19, %s26
    %p148 = scmp.eq.s32.totalorder %s147, 0
    %s150 = sadd.s32 %s149, 1
    %s151 = scalar_select %p148, %s149, %s150
    %p154 = pneg %p148
    %p155 = scmp.eq.s32.totalorder %s19, 1
    %p156 = por %p154, %p155
    %p157 = scmp.ne.s32.totalorder %s149, %s152
    %p158 = scmp.eq.s32.totalorder %s19, 0
    %p159 = por %p157, %p158
    %p160 = scmp.ne.s32.totalorder %s149, %s152
    %p161 = scmp.eq.s32.totalorder %s24, 1
    %p162 = por %p160, %p161
    %p163 = scmp.ne.s32.totalorder %s152, %s153
    %p164 = scmp.eq.s32.totalorder %s24, 0
    %p165 = por %p163, %p164
    %p166 = scmp.ne.s32.totalorder %s152, %s153
    %p167 = scmp.eq.s32.totalorder %s25, 1
    %p168 = por %p166, %p167
    %p170 = scmp.ne.s32.totalorder %s153, %s169
    %p171 = scmp.eq.s32.totalorder %s25, 0
    %p172 = por %p170, %p171
    %p173 = scmp.le.s32.totalorder 1, %s19
    %p174 = scmp.lt.s32.totalorder %s19, 3
    %p175 = pnand %p173, %p174
    %p176 = pneg %p175
    // Predicated region
    $region9: #{defaultnet_forward.8} parent=5 // pred_check
      _
    $region10: #{defaultnet_forward.8} parent=5 // pred_check_branch
      %178 = sbr.rel (%p175) target = $region12
    $region11: #{defaultnet_forward.8} parent=5 // pred_region
      %s179 = ssub.s32 %s19, 1
      // Predicated region
      $region13: #{defaultnet_forward.8} parent=11 // pred_check
        %p180 = pneg %p92
      $region14: #{defaultnet_forward.8} parent=11 // pred_check_branch
        %182 = sbr.rel (%p180) target = $region16
      $region15: #{defaultnet_forward.8} parent=11 // pred_region
        _
      $region16: #{defaultnet_forward.8} parent=11 // pred_fallthru
        _
      // Predicated region
      $region17: #{defaultnet_forward.8} parent=11 // pred_check
        %p183 = pneg %p113
      $region18: #{defaultnet_forward.8} parent=11 // pred_check_branch
        %185 = sbr.rel (%p183) target = $region20
      $region19: #{defaultnet_forward.8} parent=11 // pred_region
        _
      $region20: #{defaultnet_forward.8} parent=11 // pred_fallthru
        _
    $region12: #{defaultnet_forward.8} parent=5 // pred_fallthru
      _
    %p186 = scmp.lt.s32.totalorder %s19, 2
    // Predicated region
    $region21: #{defaultnet_forward.8} parent=5 // pred_check
      %p187 = pneg %p186
    $region22: #{defaultnet_forward.8} parent=5 // pred_check_branch
      %189 = sbr.rel (%p187) target = $region24
    $region23: #{defaultnet_forward.8} parent=5 // pred_region
      // Predicated region
      $region25: #{defaultnet_forward.8} parent=23 // pred_check
        %p190 = pneg %p39
      $region26: #{defaultnet_forward.8} parent=23 // pred_check_branch
        %192 = sbr.rel (%p190) target = $region28
      $region27: #{defaultnet_forward.8} parent=23 // pred_region
        %p193 = scmp.lt.s32.totalorder %s19, 1
        %s194 = scalar_select %p193, %s19, 1
        %s195 = smul.addr %s194, 6
        %s196 = smul.addr %s195, 8
        %s197 = scalar_lea.vmem %s1, %s196
      $region28: #{defaultnet_forward.8} parent=23 // pred_fallthru
        _
      // Predicated region
      $region29: #{defaultnet_forward.8} parent=23 // pred_check
        %p198 = pneg %p65
      $region30: #{defaultnet_forward.8} parent=23 // pred_check_branch
        %200 = sbr.rel (%p198) target = $region32
      $region31: #{defaultnet_forward.8} parent=23 // pred_region
        %p201 = scmp.lt.s32.totalorder %s19, 1
        %s202 = scalar_select %p201, %s19, 1
        %s203 = smul.addr %s202, 6
        %s204 = smul.addr %s203, 8
        %s205 = scalar_lea.vmem %s2, %s204
      $region32: #{defaultnet_forward.8} parent=23 // pred_fallthru
        _
    $region24: #{defaultnet_forward.8} parent=5 // pred_fallthru
      _
    %p206 = scmp.le.s32.totalorder 1, %s19
    %p207 = scmp.lt.s32.totalorder %s19, 3
    %p208 = pnand %p206, %p207
    %p209 = pneg %p208
    // Predicated region
    $region33: #{defaultnet_forward.8} parent=5 // pred_check
      _
    $region34: #{defaultnet_forward.8} parent=5 // pred_check_branch
      %211 = sbr.rel (%p208) target = $region36
    $region35: #{defaultnet_forward.8} parent=5 // pred_region
      %s212 = ssub.s32 %s19, 1
      %p213 = scmp.lt.s32.totalorder %s24, 1
      %s214 = scalar_select %p213, %s24, 1
      %s215 = smul.addr %s214, 6
      %s216 = smul.addr %s215, 8
      %s217 = scalar_lea.vmem %s1, %s216
      %p218 = pneg %p45
      %p219 = pneg %p42
      %p220 = scmp.lt.s32.totalorder %s24, 1
      %s221 = scalar_select %p220, %s24, 1
      %s222 = smul.addr %s221, 6
      %s223 = smul.addr %s222, 8
      %s224 = scalar_lea.vmem %s2, %s223
      %p225 = pneg %p71
      %p226 = pneg %p68
      %p227 = pneg %p92
      %p228 = pneg %p89
      %p229 = pneg %p113
      %p230 = pneg %p110
      %p231 = pneg %p139
      %p232 = pneg %p136
      %p233 = scmp.lt.s32.totalorder %s24, 1
      %s234 = scalar_select %p233, %s24, 1
      %s235 = smul.addr %s234, 6
      %s236 = smul.addr %s235, 8
      %s237 = scalar_lea.vmem %s5, %s236
      %p238 = pneg %p165
      %p239 = pneg %p162
      %p240 = scmp.lt.s32.totalorder %s24, 1
      %s241 = scalar_select %p240, %s24, 1
      %s242 = smul.addr %s241, 6
      %s243 = smul.addr %s242, 8
      %s244 = scalar_lea.vmem %s6, %s243
      %p245 = scmp.lt.s32.totalorder %s24, 1
      %s246 = scalar_select %p245, %s24, 1
      %s247 = smul.addr %s246, 6
      %s248 = smul.addr %s247, 8
      %s249 = scalar_lea.vmem %s1, %s248
      %p250 = scmp.lt.s32.totalorder %s24, 1
      %s251 = scalar_select %p250, %s24, 1
      %s252 = smul.addr %s251, 6
      %s253 = smul.addr %s252, 8
      %s254 = scalar_lea.vmem %s2, %s253
      %p255 = scmp.lt.s32.totalorder %s24, 1
      %s256 = scalar_select %p255, %s24, 1
      %s257 = smul.addr %s256, 6
      %s258 = smul.addr %s257, 8
      %s259 = scalar_lea.vmem %s5, %s258
      %p260 = scmp.lt.s32.totalorder %s24, 1
      %s261 = scalar_select %p260, %s24, 1
      %s262 = smul.addr %s261, 6
      %s263 = smul.addr %s262, 8
      %s264 = scalar_lea.vmem %s6, %s263
      %s265 = sld [smem:[#allocation3 + %s24]]
      %v266 = vld [vmem:[%s249] sm:$0xff]
      %v267 = vld [vmem:[%s249 + $0x8] sm:$0xff]
      %v268 = vld [vmem:[%s249 + $0x10] sm:$0xff]
      %v269 = vld [vmem:[%s249 + $0x18] sm:$0xff]
      %v270 = vld [vmem:[%s249 + $0x20] sm:$0xff]
      %v271 = vld [vmem:[%s249 + $0x28] sm:$0xff]
      %v272 = vld [vmem:[%s254] sm:$0xff]
      %v273 = vld [vmem:[%s254 + $0x8] sm:$0xff]
      %v274 = vld [vmem:[%s254 + $0x10] sm:$0xff]
      %v275 = vld [vmem:[%s254 + $0x18] sm:$0xff]
      %v276 = vld [vmem:[%s254 + $0x20] sm:$0xff]
      %v277 = vld [vmem:[%s254 + $0x28] sm:$0xff]
      %v278 = vld [vmem:[%s3] sm:$0xff]
      %v279 = vld [vmem:[%s3 + $0x8] sm:$0xff]
      %v280 = vld [vmem:[%s4] sm:$0xff]
      %v281 = vld [vmem:[%s4 + $0x8] sm:$0xff]
      %v282 = vsub.f32 0.0, %v280
      %v283 = vsub.f32 0.0, %v281
      %v284 = vmul.f32 %v278, %v278
      %v285 = vmul.f32 %v279, %v279
      %v286 = vmul.f32 %v280, %v280
      %v287 = vmul.f32 %v281, %v281
      %v288 = vadd.f32 %v284, %v286
      %v289 = vadd.f32 %v285, %v287
      %v290 = vmul.f32 %v278, %v266
      %v291 = vmul.f32 %v279, %v267
      %v292 = vmul.f32 %v278, %v268
      %v293 = vmul.f32 %v279, %v269
      %v294 = vmul.f32 %v278, %v270
      %v295 = vmul.f32 %v279, %v271
      %v296 = vmul.f32 %v280, %v272
      %v297 = vmul.f32 %v281, %v273
      %v298 = vmul.f32 %v280, %v274
      %v299 = vmul.f32 %v281, %v275
      %v300 = vmul.f32 %v280, %v276
      %v301 = vmul.f32 %v281, %v277
      %v302 = vsub.f32 %v290, %v296
      %v303 = vsub.f32 %v291, %v297
      %v304 = vsub.f32 %v292, %v298
      %v305 = vsub.f32 %v293, %v299
      %v306 = vsub.f32 %v294, %v300
      %v307 = vsub.f32 %v295, %v301
      %v308 = vmul.f32 %v278, %v272
      %v309 = vmul.f32 %v279, %v273
      %v310 = vmul.f32 %v278, %v274
      %v311 = vmul.f32 %v279, %v275
      %v312 = vmul.f32 %v278, %v276
      %v313 = vmul.f32 %v279, %v277
      %v314 = vmul.f32 %v280, %v266
      %v315 = vmul.f32 %v281, %v267
      %v316 = vmul.f32 %v280, %v268
      %v317 = vmul.f32 %v281, %v269
      %v318 = vmul.f32 %v280, %v270
      %v319 = vmul.f32 %v281, %v271
      %v320 = vadd.f32 %v308, %v314
      %v321 = vadd.f32 %v309, %v315
      %v322 = vadd.f32 %v310, %v316
      %v323 = vadd.f32 %v311, %v317
      %v324 = vadd.f32 %v312, %v318
      %v325 = vadd.f32 %v313, %v319
      %329 = vrot.lane.b32.xlu0 %v302, 120
      %v330 = vpop.permute.xlu0 %329
      %331 = vrot.lane.b32.xlu0 %v304, 120
      %v332 = vpop.permute.xlu0 %331
      %333 = vrot.lane.b32.xlu0 %v306, 120
      %v334 = vpop.permute.xlu0 %333
      %v338 = vadd.f32 %v302, %v330
      %v339 = vadd.f32 %v304, %v332
      %v340 = vadd.f32 %v306, %v334
      %v341 = vadd.f32 %v338, %v303
      %v342 = vadd.f32 %v339, %v305
      %v343 = vadd.f32 %v340, %v307
      %347 = vrot.lane.b32.xlu0 %v303, 120
      %v348 = vpop.permute.xlu0 %347
      %349 = vrot.lane.b32.xlu0 %v305, 120
      %v350 = vpop.permute.xlu0 %349
      %351 = vrot.lane.b32.xlu0 %v307, 120
      %v352 = vpop.permute.xlu0 %351
      %v356 = vadd.f32 %v341, %v348
      %v357 = vadd.f32 %v342, %v350
      %v358 = vadd.f32 %v343, %v352
      %v359 = vmul.f32 %v356, 0.25
      %v360 = vmul.f32 %v357, 0.25
      %v361 = vmul.f32 %v358, 0.25
      %365 = vrot.lane.b32.xlu0 %v320, 120
      %v366 = vpop.permute.xlu0 %365
      %367 = vrot.lane.b32.xlu0 %v322, 120
      %v368 = vpop.permute.xlu0 %367
      %369 = vrot.lane.b32.xlu0 %v324, 120
      %v370 = vpop.permute.xlu0 %369
      %v374 = vadd.f32 %v320, %v366
      %v375 = vadd.f32 %v322, %v368
      %v376 = vadd.f32 %v324, %v370
      %v377 = vadd.f32 %v374, %v321
      %v378 = vadd.f32 %v375, %v323
      %v379 = vadd.f32 %v376, %v325
      %383 = vrot.lane.b32.xlu0 %v321, 120
      %v384 = vpop.permute.xlu0 %383
      %385 = vrot.lane.b32.xlu0 %v323, 120
      %v386 = vpop.permute.xlu0 %385
      %387 = vrot.lane.b32.xlu0 %v325, 120
      %v388 = vpop.permute.xlu0 %387
      %v392 = vadd.f32 %v377, %v384
      %v393 = vadd.f32 %v378, %v386
      %v394 = vadd.f32 %v379, %v388
      %v395 = vmul.f32 %v392, 0.25
      %v396 = vmul.f32 %v393, 0.25
      %v397 = vmul.f32 %v394, 0.25
      %399 = vrot.lane.b32.xlu0 %v288, 120
      %v400 = vpop.permute.xlu0 %399
      %v402 = vadd.f32 %v288, %v400
      %v403 = vadd.f32 %v402, %v289
      %405 = vrot.lane.b32.xlu0 %v289, 120
      %v406 = vpop.permute.xlu0 %405
      %v408 = vadd.f32 %v403, %v406
      %v409 = vmul.f32 %v408, 0.25
      %v410 = vstv %s265
      %v411 = vadd.f32 %v409, %v410
      %v412 = vrcp.pop %v411
      %v413 = vmul.f32 1.0, %v412
      %v414 = vmul.f32 %v359, %v413
      %v415 = vmul.f32 %v360, %v413
      %v416 = vmul.f32 %v361, %v413
      %v417 = vmul.f32 %v395, %v413
      %v418 = vmul.f32 %v396, %v413
      %v419 = vmul.f32 %v397, %v413
      %423 = vrot.lane.b32.xlu0 %v414, 8
      %v424 = vpop.permute.xlu0 %423
      %425 = vrot.lane.b32.xlu0 %v415, 8
      %v426 = vpop.permute.xlu0 %425
      %427 = vrot.lane.b32.xlu0 %v416, 8
      %v428 = vpop.permute.xlu0 %427
      %vm432 = vcmask 64512
      %v433 = vsel %vm432, %v414, %v424
      %v434 = vsel %vm432, %v415, %v426
      %v435 = vsel %vm432, %v416, %v428
      %439 = vrot.lane.b32.xlu0 %v417, 8
      %v440 = vpop.permute.xlu0 %439
      %441 = vrot.lane.b32.xlu0 %v418, 8
      %v442 = vpop.permute.xlu0 %441
      %443 = vrot.lane.b32.xlu0 %v419, 8
      %v444 = vpop.permute.xlu0 %443
      %v448 = vsel %vm432, %v417, %v440
      %v449 = vsel %vm432, %v418, %v442
      %v450 = vsel %vm432, %v419, %v444
      %v451 = vmul.f32 %v278, %v433
      %v452 = vmul.f32 %v279, %v433
      %v453 = vmul.f32 %v278, %v434
      %v454 = vmul.f32 %v279, %v434
      %v455 = vmul.f32 %v278, %v435
      %v456 = vmul.f32 %v279, %v435
      %v457 = vmul.f32 %v282, %v448
      %v458 = vmul.f32 %v283, %v448
      %v459 = vmul.f32 %v282, %v449
      %v460 = vmul.f32 %v283, %v449
      %v461 = vmul.f32 %v282, %v450
      %v462 = vmul.f32 %v283, %v450
      %v463 = vsub.f32 %v451, %v457
      %v464 = vsub.f32 %v452, %v458
      %v465 = vsub.f32 %v453, %v459
      %v466 = vsub.f32 %v454, %v460
      %v467 = vsub.f32 %v455, %v461
      %v468 = vsub.f32 %v456, %v462
      %v469 = vmul.f32 %v278, %v448
      %v470 = vmul.f32 %v279, %v448
      %v471 = vmul.f32 %v278, %v449
      %v472 = vmul.f32 %v279, %v449
      %v473 = vmul.f32 %v278, %v450
      %v474 = vmul.f32 %v279, %v450
      %v475 = vmul.f32 %v282, %v433
      %v476 = vmul.f32 %v283, %v433
      %v477 = vmul.f32 %v282, %v434
      %v478 = vmul.f32 %v283, %v434
      %v479 = vmul.f32 %v282, %v435
      %v480 = vmul.f32 %v283, %v435
      %v481 = vadd.f32 %v469, %v475
      %v482 = vadd.f32 %v470, %v476
      %v483 = vadd.f32 %v471, %v477
      %v484 = vadd.f32 %v472, %v478
      %v485 = vadd.f32 %v473, %v479
      %v486 = vadd.f32 %v474, %v480
      %v487 = vstv %s265
      %v488 = vrcp.pop %v487
      %s489 = vtos %v488
      %v490 = vsub.f32 %v266, %v463
      %v491 = vsub.f32 %v267, %v464
      %v492 = vsub.f32 %v268, %v465
      %v493 = vsub.f32 %v269, %v466
      %v494 = vsub.f32 %v270, %v467
      %v495 = vsub.f32 %v271, %v468
      %v496 = vstv %s489
      %v497 = vmul.f32 %v490, %v496
      %v498 = vmul.f32 %v491, %v496
      %v499 = vmul.f32 %v492, %v496
      %v500 = vmul.f32 %v493, %v496
      %v501 = vmul.f32 %v494, %v496
      %v502 = vmul.f32 %v495, %v496
      %vm503 = vcmask 130048
      %504 = vst.msk [vmem:[%s259] sm:$0xff] %vm503, %v497
      %505 = vst.msk [vmem:[%s259 + $0x8] sm:$0xff] %vm503, %v498
      %506 = vst.msk [vmem:[%s259 + $0x10] sm:$0xff] %vm503, %v499
      %507 = vst.msk [vmem:[%s259 + $0x18] sm:$0xff] %vm503, %v500
      %508 = vst.msk [vmem:[%s259 + $0x20] sm:$0xff] %vm503, %v501
      %509 = vst.msk [vmem:[%s259 + $0x28] sm:$0xff] %vm503, %v502
      %v510 = vsub.f32 %v272, %v481
      %v511 = vsub.f32 %v273, %v482
      %v512 = vsub.f32 %v274, %v483
      %v513 = vsub.f32 %v275, %v484
      %v514 = vsub.f32 %v276, %v485
      %v515 = vsub.f32 %v277, %v486
      %v516 = vmul.f32 %v510, %v496
      %v517 = vmul.f32 %v511, %v496
      %v518 = vmul.f32 %v512, %v496
      %v519 = vmul.f32 %v513, %v496
      %v520 = vmul.f32 %v514, %v496
      %v521 = vmul.f32 %v515, %v496
      %522 = vst.msk [vmem:[%s264] sm:$0xff] %vm503, %v516
      %523 = vst.msk [vmem:[%s264 + $0x8] sm:$0xff] %vm503, %v517
      %524 = vst.msk [vmem:[%s264 + $0x10] sm:$0xff] %vm503, %v518
      %525 = vst.msk [vmem:[%s264 + $0x18] sm:$0xff] %vm503, %v519
      %526 = vst.msk [vmem:[%s264 + $0x20] sm:$0xff] %vm503, %v520
      %527 = vst.msk [vmem:[%s264 + $0x28] sm:$0xff] %vm503, %v521
      %p528 = scmp.lt.s32.totalorder %s24, 1
      %s529 = scalar_select %p528, %s24, 1
      %s530 = smul.addr %s529, 6
      %s531 = smul.addr %s530, 8
      %s532 = scalar_lea.vmem %s5, %s531
      %p533 = scmp.lt.s32.totalorder %s24, 1
      %s534 = scalar_select %p533, %s24, 1
      %s535 = smul.addr %s534, 6
      %s536 = smul.addr %s535, 8
      %s537 = scalar_lea.vmem %s6, %s536
      // Predicated region
      $region37: #{defaultnet_forward.8} parent=35 // pred_check
        %p538 = pneg %p136
      $region38: #{defaultnet_forward.8} parent=35 // pred_check_branch
        %540 = sbr.rel (%p538) target = $region40
      $region39: #{defaultnet_forward.8} parent=35 // pred_region
        _
      $region40: #{defaultnet_forward.8} parent=35 // pred_fallthru
        _
      // Predicated region
      $region41: #{defaultnet_forward.8} parent=35 // pred_check
        %p541 = pneg %p162
      $region42: #{defaultnet_forward.8} parent=35 // pred_check_branch
        %543 = sbr.rel (%p541) target = $region44
      $region43: #{defaultnet_forward.8} parent=35 // pred_region
        _
      $region44: #{defaultnet_forward.8} parent=35 // pred_fallthru
        _
    $region36: #{defaultnet_forward.8} parent=5 // pred_fallthru
      _
    %p544 = scmp.le.s32.totalorder 2, %s19
    // Predicated region
    $region45: #{defaultnet_forward.8} parent=5 // pred_check
      %p545 = pneg %p544
    $region46: #{defaultnet_forward.8} parent=5 // pred_check_branch
      %547 = sbr.rel (%p545) target = $region48
    $region47: #{defaultnet_forward.8} parent=5 // pred_region
      %s548 = ssub.s32 %s19, 2
      // Predicated region
      $region49: #{defaultnet_forward.8} parent=47 // pred_check
        %p549 = pneg %p142
      $region50: #{defaultnet_forward.8} parent=47 // pred_check_branch
        %551 = sbr.rel (%p549) target = $region52
      $region51: #{defaultnet_forward.8} parent=47 // pred_region
        %p552 = scmp.lt.s32.totalorder %s25, 1
        %s553 = scalar_select %p552, %s25, 1
        %s554 = smul.addr %s553, 6
        %s555 = smul.addr %s554, 8
        %s556 = scalar_lea.vmem %s5, %s555
      $region52: #{defaultnet_forward.8} parent=47 // pred_fallthru
        _
      // Predicated region
      $region53: #{defaultnet_forward.8} parent=47 // pred_check
        %p557 = pneg %p168
      $region54: #{defaultnet_forward.8} parent=47 // pred_check_branch
        %559 = sbr.rel (%p557) target = $region56
      $region55: #{defaultnet_forward.8} parent=47 // pred_region
        %p560 = scmp.lt.s32.totalorder %s25, 1
        %s561 = scalar_select %p560, %s25, 1
        %s562 = smul.addr %s561, 6
        %s563 = smul.addr %s562, 8
        %s564 = scalar_lea.vmem %s6, %s563
      $region56: #{defaultnet_forward.8} parent=47 // pred_fallthru
        _
    $region48: #{defaultnet_forward.8} parent=5 // pred_fallthru
      _
  $region6: #{defaultnet_forward.8} parent=0 // loop_footer
    %s23 = sadd.s32 1, %s19
  $region7: #{defaultnet_forward.8} parent=0 // loop_footer_branch
    %18 = sbr.rel target = $region3
  $region8: #{defaultnet_forward.8} parent=0 // loop_exit
    _

// kernel: defaultnet_forward.9
$region0: #{defaultnet_forward.9}
  #allocation0 [shape = 'u32[]', space=smem, size = 0x4, offset = 0x4, fixed_abs, tag = 'smem constant byte address 0x4 - core index']
  #allocation1 [shape = 'u32[144,128]{1,0:T(1,128)}', space=vmem, size = 0x12000, scoped, tag = 'internal scratch']
  #allocation2 [shape = 's32[1]{0}', space=sflag, size = 0x4, scoped, tag = 'scoped memory for defaultnet_forward.9']
  #allocation3 [shape = 'u8[512]{0}', space=smem, size = 0x200, scoped, tag = 'prefetched SMEM operand 0']
  %s0 = inlined_call_operand.vmem [shape: f32[2], index: 0, kind: input, shape index: {}]
  %s1 = inlined_call_operand.vmem [shape: f32[2,3,16,16], index: 1, kind: input, shape index: {}]
  %s2 = inlined_call_operand.vmem [shape: f32[2,1,16,16], index: 2, kind: input, shape index: {}]
  %s3 = inlined_call_operand.vmem [shape: f32[2,3,16,16], index: 3, kind: output, shape index: {}]
  %s4 = sld [smem:[#allocation0]]
  $region41: #{defaultnet_forward.9} parent=0
    _
  %s6 = ssub.s32 1, %s4
  %s7 = scalar_select 0, %s6, %s4
  %s8 = sshll.u32 %s0, 4
  %s9 = int_to_ptr.vmem [resolvable:$true] %s8
  %11 = dma.vmem_to_smem %s9, 16, [#allocation3], [#allocation2]
  %12 = dma.done [#allocation2], 16
  %13 = sfence
  loop: start=0, step=1, limit=4
  $region2: #{defaultnet_forward.9} parent=0 // loop_pre_header
    _
  $region3: #{defaultnet_forward.9} parent=0 // loop_header
    %s15 = sphi 0, %s19
    %p16 = scmp.ge.s32.totalorder %s15, 4
    %s25 = sphi 0, %s27
    %s28 = sphi 0, %s25
    %s29 = sphi 0, %s28
    %s45 = sphi 0, %s29
    %s51 = sphi 0, %s53
    %s54 = sphi 0, %s51
    %s55 = sphi 0, %s54
    %s71 = sphi 0, %s55
    %s77 = sphi 0, %s79
    %s80 = sphi 0, %s77
    %s81 = sphi 0, %s80
    %s97 = sphi 0, %s81
  $region4: #{defaultnet_forward.9} parent=0 // loop_header_branch
    %18 = sbr.rel (%p16) target = $region8
  $region5: #{defaultnet_forward.9} parent=0 // loop_body
    %s20 = ssub.s32 %s15, 1
    %s21 = ssub.s32 %s15, 2
    %s22 = sadd.s32 %s15, 1
    %s23 = ssub.s32 %s15, %s22
    %p24 = scmp.eq.s32.totalorder %s23, 0
    %s26 = sadd.s32 %s25, 1
    %s27 = scalar_select %p24, %s25, %s26
    %p30 = pneg %p24
    %p31 = scmp.eq.s32.totalorder %s15, 1
    %p32 = por %p30, %p31
    %p33 = scmp.ne.s32.totalorder %s25, %s28
    %p34 = scmp.eq.s32.totalorder %s15, 0
    %p35 = por %p33, %p34
    %p36 = scmp.ne.s32.totalorder %s25, %s28
    %p37 = scmp.eq.s32.totalorder %s20, 1
    %p38 = por %p36, %p37
    %p39 = scmp.ne.s32.totalorder %s28, %s29
    %p40 = scmp.eq.s32.totalorder %s20, 0
    %p41 = por %p39, %p40
    %p42 = scmp.ne.s32.totalorder %s28, %s29
    %p43 = scmp.eq.s32.totalorder %s21, 1
    %p44 = por %p42, %p43
    %p46 = scmp.ne.s32.totalorder %s29, %s45
    %p47 = scmp.eq.s32.totalorder %s21, 0
    %p48 = por %p46, %p47
    %s49 = ssub.s32 %s15, %s22
    %p50 = scmp.eq.s32.totalorder %s49, 0
    %s52 = sadd.s32 %s51, 1
    %s53 = scalar_select %p50, %s51, %s52
    %p56 = pneg %p50
    %p57 = scmp.eq.s32.totalorder %s15, 1
    %p58 = por %p56, %p57
    %p59 = scmp.ne.s32.totalorder %s51, %s54
    %p60 = scmp.eq.s32.totalorder %s15, 0
    %p61 = por %p59, %p60
    %p62 = scmp.ne.s32.totalorder %s51, %s54
    %p63 = scmp.eq.s32.totalorder %s20, 1
    %p64 = por %p62, %p63
    %p65 = scmp.ne.s32.totalorder %s54, %s55
    %p66 = scmp.eq.s32.totalorder %s20, 0
    %p67 = por %p65, %p66
    %p68 = scmp.ne.s32.totalorder %s54, %s55
    %p69 = scmp.eq.s32.totalorder %s21, 1
    %p70 = por %p68, %p69
    %p72 = scmp.ne.s32.totalorder %s55, %s71
    %p73 = scmp.eq.s32.totalorder %s21, 0
    %p74 = por %p72, %p73
    %s75 = ssub.s32 %s15, %s22
    %p76 = scmp.eq.s32.totalorder %s75, 0
    %s78 = sadd.s32 %s77, 1
    %s79 = scalar_select %p76, %s77, %s78
    %p82 = pneg %p76
    %p83 = scmp.eq.s32.totalorder %s15, 1
    %p84 = por %p82, %p83
    %p85 = scmp.ne.s32.totalorder %s77, %s80
    %p86 = scmp.eq.s32.totalorder %s15, 0
    %p87 = por %p85, %p86
    %p88 = scmp.ne.s32.totalorder %s77, %s80
    %p89 = scmp.eq.s32.totalorder %s20, 1
    %p90 = por %p88, %p89
    %p91 = scmp.ne.s32.totalorder %s80, %s81
    %p92 = scmp.eq.s32.totalorder %s20, 0
    %p93 = por %p91, %p92
    %p94 = scmp.ne.s32.totalorder %s80, %s81
    %p95 = scmp.eq.s32.totalorder %s21, 1
    %p96 = por %p94, %p95
    %p98 = scmp.ne.s32.totalorder %s81, %s97
    %p99 = scmp.eq.s32.totalorder %s21, 0
    %p100 = por %p98, %p99
    %p101 = scmp.le.s32.totalorder 1, %s15
    %p102 = scmp.lt.s32.totalorder %s15, 3
    %p103 = pnand %p101, %p102
    %p104 = pneg %p103
    // Predicated region
    $region9: #{defaultnet_forward.9} parent=5 // pred_check
      _
    $region10: #{defaultnet_forward.9} parent=5 // pred_check_branch
      %106 = sbr.rel (%p103) target = $region12
    $region11: #{defaultnet_forward.9} parent=5 // pred_region
      %s107 = ssub.s32 %s15, 1
    $region12: #{defaultnet_forward.9} parent=5 // pred_fallthru
      _
    %p108 = scmp.lt.s32.totalorder %s15, 2
    // Predicated region
    $region13: #{defaultnet_forward.9} parent=5 // pred_check
      %p109 = pneg %p108
    $region14: #{defaultnet_forward.9} parent=5 // pred_check_branch
      %111 = sbr.rel (%p109) target = $region16
    $region15: #{defaultnet_forward.9} parent=5 // pred_region
      // Predicated region
      $region17: #{defaultnet_forward.9} parent=15 // pred_check
        %p112 = pneg %p35
      $region18: #{defaultnet_forward.9} parent=15 // pred_check_branch
        %114 = sbr.rel (%p112) target = $region20
      $region19: #{defaultnet_forward.9} parent=15 // pred_region
        %p115 = scmp.lt.s32.totalorder %s15, 1
        %s116 = scalar_select %p115, %s15, 1
        %s117 = smul.addr %s116, 6
        %s118 = smul.addr %s117, 8
        %s119 = scalar_lea.vmem %s1, %s118
      $region20: #{defaultnet_forward.9} parent=15 // pred_fallthru
        _
      // Predicated region
      $region21: #{defaultnet_forward.9} parent=15 // pred_check
        %p120 = pneg %p61
      $region22: #{defaultnet_forward.9} parent=15 // pred_check_branch
        %122 = sbr.rel (%p120) target = $region24
      $region23: #{defaultnet_forward.9} parent=15 // pred_region
        %p123 = scmp.lt.s32.totalorder %s15, 1
        %s124 = scalar_select %p123, %s15, 1
        %s125 = smul.addr %s124, 2
        %s126 = smul.addr %s125, 8
        %s127 = scalar_lea.vmem %s2, %s126
      $region24: #{defaultnet_forward.9} parent=15 // pred_fallthru
        _
    $region16: #{defaultnet_forward.9} parent=5 // pred_fallthru
      _
    %p128 = scmp.le.s32.totalorder 1, %s15
    %p129 = scmp.lt.s32.totalorder %s15, 3
    %p130 = pnand %p128, %p129
    %p131 = pneg %p130
    // Predicated region
    $region25: #{defaultnet_forward.9} parent=5 // pred_check
      _
    $region26: #{defaultnet_forward.9} parent=5 // pred_check_branch
      %133 = sbr.rel (%p130) target = $region28
    $region27: #{defaultnet_forward.9} parent=5 // pred_region
      %s134 = ssub.s32 %s15, 1
      %p135 = scmp.lt.s32.totalorder %s20, 1
      %s136 = scalar_select %p135, %s20, 1
      %s137 = smul.addr %s136, 6
      %s138 = smul.addr %s137, 8
      %s139 = scalar_lea.vmem %s1, %s138
      %p140 = pneg %p41
      %p141 = pneg %p38
      %p142 = scmp.lt.s32.totalorder %s20, 1
      %s143 = scalar_select %p142, %s20, 1
      %s144 = smul.addr %s143, 2
      %s145 = smul.addr %s144, 8
      %s146 = scalar_lea.vmem %s2, %s145
      %p147 = pneg %p67
      %p148 = pneg %p64
      %p149 = pneg %p93
      %p150 = pneg %p90
      %p151 = scmp.lt.s32.totalorder %s20, 1
      %s152 = scalar_select %p151, %s20, 1
      %s153 = smul.addr %s152, 6
      %s154 = smul.addr %s153, 8
      %s155 = scalar_lea.vmem %s3, %s154
      %p156 = scmp.lt.s32.totalorder %s20, 1
      %s157 = scalar_select %p156, %s20, 1
      %s158 = smul.addr %s157, 6
      %s159 = smul.addr %s158, 8
      %s160 = scalar_lea.vmem %s1, %s159
      %p161 = scmp.lt.s32.totalorder %s20, 1
      %s162 = scalar_select %p161, %s20, 1
      %s163 = smul.addr %s162, 2
      %s164 = smul.addr %s163, 8
      %s165 = scalar_lea.vmem %s2, %s164
      %p166 = scmp.lt.s32.totalorder %s20, 1
      %s167 = scalar_select %p166, %s20, 1
      %s168 = smul.addr %s167, 6
      %s169 = smul.addr %s168, 8
      %s170 = scalar_lea.vmem %s3, %s169
      %s171 = sld [smem:[#allocation3 + %s20]]
      %v172 = vld [vmem:[%s160] sm:$0xff]
      %v173 = vld [vmem:[%s160 + $0x8] sm:$0xff]
      %v174 = vld [vmem:[%s160 + $0x10] sm:$0xff]
      %v175 = vld [vmem:[%s160 + $0x18] sm:$0xff]
      %v176 = vld [vmem:[%s160 + $0x20] sm:$0xff]
      %v177 = vld [vmem:[%s160 + $0x28] sm:$0xff]
      %s178 = sadd.f32 %s171, 1.0
      %v179 = vstv %s178
      %v180 = vmul.f32 %v172, %v179
      %v181 = vmul.f32 %v173, %v179
      %v182 = vmul.f32 %v174, %v179
      %v183 = vmul.f32 %v175, %v179
      %v184 = vmul.f32 %v176, %v179
      %v185 = vmul.f32 %v177, %v179
      %v186 = vld [vmem:[%s165] sm:$0xff]
      %v187 = vld [vmem:[%s165 + $0x8] sm:$0xff]
      %v188 = vstv %s171
      %v189 = vadd.f32 %v188, %v186
      %v190 = vadd.f32 %v188, %v187
      %v191 = vrcp.pop %v189
      %v192 = vmul.f32 %v180, %v191
      %v193 = vrcp.pop %v190
      %v194 = vmul.f32 %v181, %v193
      %v195 = vmul.f32 %v182, %v191
      %v196 = vmul.f32 %v183, %v193
      %v197 = vmul.f32 %v184, %v191
      %v198 = vmul.f32 %v185, %v193
      %vm199 = vcmask 130048
      %200 = vst.msk [vmem:[%s170] sm:$0xff] %vm199, %v192
      %201 = vst.msk [vmem:[%s170 + $0x8] sm:$0xff] %vm199, %v194
      %202 = vst.msk [vmem:[%s170 + $0x10] sm:$0xff] %vm199, %v195
      %203 = vst.msk [vmem:[%s170 + $0x18] sm:$0xff] %vm199, %v196
      %204 = vst.msk [vmem:[%s170 + $0x20] sm:$0xff] %vm199, %v197
      %205 = vst.msk [vmem:[%s170 + $0x28] sm:$0xff] %vm199, %v198
      %p206 = scmp.lt.s32.totalorder %s20, 1
      %s207 = scalar_select %p206, %s20, 1
      %s208 = smul.addr %s207, 6
      %s209 = smul.addr %s208, 8
      %s210 = scalar_lea.vmem %s3, %s209
      // Predicated region
      $region29: #{defaultnet_forward.9} parent=27 // pred_check
        %p211 = pneg %p90
      $region30: #{defaultnet_forward.9} parent=27 // pred_check_branch
        %213 = sbr.rel (%p211) target = $region32
      $region31: #{defaultnet_forward.9} parent=27 // pred_region
        _
      $region32: #{defaultnet_forward.9} parent=27 // pred_fallthru
        _
    $region28: #{defaultnet_forward.9} parent=5 // pred_fallthru
      _
    %p214 = scmp.le.s32.totalorder 2, %s15
    // Predicated region
    $region33: #{defaultnet_forward.9} parent=5 // pred_check
      %p215 = pneg %p214
    $region34: #{defaultnet_forward.9} parent=5 // pred_check_branch
      %217 = sbr.rel (%p215) target = $region36
    $region35: #{defaultnet_forward.9} parent=5 // pred_region
      %s218 = ssub.s32 %s15, 2
      // Predicated region
      $region37: #{defaultnet_forward.9} parent=35 // pred_check
        %p219 = pneg %p96
      $region38: #{defaultnet_forward.9} parent=35 // pred_check_branch
        %221 = sbr.rel (%p219) target = $region40
      $region39: #{defaultnet_forward.9} parent=35 // pred_region
        %p222 = scmp.lt.s32.totalorder %s21, 1
        %s223 = scalar_select %p222, %s21, 1
        %s224 = smul.addr %s223, 6
        %s225 = smul.addr %s224, 8
        %s226 = scalar_lea.vmem %s3, %s225
      $region40: #{defaultnet_forward.9} parent=35 // pred_fallthru
        _
    $region36: #{defaultnet_forward.9} parent=5 // pred_fallthru
      _
  $region6: #{defaultnet_forward.9} parent=0 // loop_footer
    %s19 = sadd.s32 1, %s15
  $region7: #{defaultnet_forward.9} parent=0 // loop_footer_branch
    %14 = sbr.rel target = $region3
  $region8: #{defaultnet_forward.9} parent=0 // loop_exit
    _

// kernel: defaultnet_forward.13
$region0: #{defaultnet_forward.13}
  #allocation0 [shape = 'u32[]', space=smem, size = 0x4, offset = 0x4, fixed_abs, tag = 'smem constant byte address 0x4 - core index']
  #allocation1 [shape = 'u32[144,128]{1,0:T(1,128)}', space=vmem, size = 0x12000, scoped, tag = 'internal scratch']
  #allocation2 [shape = 's32[1]{0}', space=sflag, size = 0x4, scoped, tag = 'scoped memory for defaultnet_forward.13']
  #allocation3 [shape = 'u8[512]{0}', space=smem, size = 0x200, scoped, tag = 'prefetched SMEM operand 0']
  %s0 = inlined_call_operand.vmem [shape: f32[2], index: 0, kind: input, shape index: {}]
  %s1 = inlined_call_operand.vmem [shape: f32[2,3,16,16], index: 1, kind: input, shape index: {}]
  %s2 = inlined_call_operand.vmem [shape: f32[2,1,16,16], index: 2, kind: input, shape index: {}]
  %s3 = inlined_call_operand.hbm [shape: f32[2,3,16,16], index: 3, kind: output, shape index: {}]
  %s4 = sld [smem:[#allocation0]]
  $region41: #{defaultnet_forward.13} parent=0
    _
  %s6 = ssub.s32 1, %s4
  %s7 = scalar_select 0, %s6, %s4
  %s8 = sshll.u32 %s0, 4
  %s9 = int_to_ptr.vmem [resolvable:$true] %s8
  %11 = dma.vmem_to_smem %s9, 16, [#allocation3], [#allocation2]
  %12 = dma.done [#allocation2], 16
  %13 = sfence
  $region1: #{defaultnet_forward.13} parent=0
    #allocation4 [shape = 'u8[49152]{0}', space=vmem, size = 0xc000, scoped, tag = 'output window, operand 0']
    #allocation5 [shape = 's32[2]{0}', space=sflag, size = 0x8, scoped, tag = 'scoped memory for defaultnet_forward.13']
    %14 = vsyncpa [#allocation5], 0
    %s15 = scalar_lea.sflag [#allocation5], 1
    %16 = vsyncpa %s15, 0
    loop: start=0, step=1, limit=4
    $region2: #{defaultnet_forward.13} parent=1 // loop_pre_header
      _
    $region3: #{defaultnet_forward.13} parent=1 // loop_header
      %s18 = sphi 0, %s22
      %p19 = scmp.ge.s32.totalorder %s18, 4
      %s28 = sphi 0, %s30
      %s31 = sphi 0, %s28
      %s32 = sphi 0, %s31
      %s48 = sphi 0, %s32
      %s54 = sphi 0, %s56
      %s57 = sphi 0, %s54
      %s58 = sphi 0, %s57
      %s74 = sphi 0, %s58
      %s80 = sphi 0, %s82
      %s83 = sphi 0, %s80
      %s84 = sphi 0, %s83
      %s100 = sphi 0, %s84
    $region4: #{defaultnet_forward.13} parent=1 // loop_header_branch
      %21 = sbr.rel (%p19) target = $region8
    $region5: #{defaultnet_forward.13} parent=1 // loop_body
      %s23 = ssub.s32 %s18, 1
      %s24 = ssub.s32 %s18, 2
      %s25 = sadd.s32 %s18, 1
      %s26 = ssub.s32 %s18, %s25
      %p27 = scmp.eq.s32.totalorder %s26, 0
      %s29 = sadd.s32 %s28, 1
      %s30 = scalar_select %p27, %s28, %s29
      %p33 = pneg %p27
      %p34 = scmp.eq.s32.totalorder %s18, 1
      %p35 = por %p33, %p34
      %p36 = scmp.ne.s32.totalorder %s28, %s31
      %p37 = scmp.eq.s32.totalorder %s18, 0
      %p38 = por %p36, %p37
      %p39 = scmp.ne.s32.totalorder %s28, %s31
      %p40 = scmp.eq.s32.totalorder %s23, 1
      %p41 = por %p39, %p40
      %p42 = scmp.ne.s32.totalorder %s31, %s32
      %p43 = scmp.eq.s32.totalorder %s23, 0
      %p44 = por %p42, %p43
      %p45 = scmp.ne.s32.totalorder %s31, %s32
      %p46 = scmp.eq.s32.totalorder %s24, 1
      %p47 = por %p45, %p46
      %p49 = scmp.ne.s32.totalorder %s32, %s48
      %p50 = scmp.eq.s32.totalorder %s24, 0
      %p51 = por %p49, %p50
      %s52 = ssub.s32 %s18, %s25
      %p53 = scmp.eq.s32.totalorder %s52, 0
      %s55 = sadd.s32 %s54, 1
      %s56 = scalar_select %p53, %s54, %s55
      %p59 = pneg %p53
      %p60 = scmp.eq.s32.totalorder %s18, 1
      %p61 = por %p59, %p60
      %p62 = scmp.ne.s32.totalorder %s54, %s57
      %p63 = scmp.eq.s32.totalorder %s18, 0
      %p64 = por %p62, %p63
      %p65 = scmp.ne.s32.totalorder %s54, %s57
      %p66 = scmp.eq.s32.totalorder %s23, 1
      %p67 = por %p65, %p66
      %p68 = scmp.ne.s32.totalorder %s57, %s58
      %p69 = scmp.eq.s32.totalorder %s23, 0
      %p70 = por %p68, %p69
      %p71 = scmp.ne.s32.totalorder %s57, %s58
      %p72 = scmp.eq.s32.totalorder %s24, 1
      %p73 = por %p71, %p72
      %p75 = scmp.ne.s32.totalorder %s58, %s74
      %p76 = scmp.eq.s32.totalorder %s24, 0
      %p77 = por %p75, %p76
      %s78 = ssub.s32 %s18, %s25
      %p79 = scmp.eq.s32.totalorder %s78, 0
      %s81 = sadd.s32 %s80, 1
      %s82 = scalar_select %p79, %s80, %s81
      %p85 = pneg %p79
      %p86 = scmp.eq.s32.totalorder %s18, 1
      %p87 = por %p85, %p86
      %p88 = scmp.ne.s32.totalorder %s80, %s83
      %p89 = scmp.eq.s32.totalorder %s18, 0
      %p90 = por %p88, %p89
      %p91 = scmp.ne.s32.totalorder %s80, %s83
      %p92 = scmp.eq.s32.totalorder %s23, 1
      %p93 = por %p91, %p92
      %p94 = scmp.ne.s32.totalorder %s83, %s84
      %p95 = scmp.eq.s32.totalorder %s23, 0
      %p96 = por %p94, %p95
      %p97 = scmp.ne.s32.totalorder %s83, %s84
      %p98 = scmp.eq.s32.totalorder %s24, 1
      %p99 = por %p97, %p98
      %p101 = scmp.ne.s32.totalorder %s84, %s100
      %p102 = scmp.eq.s32.totalorder %s24, 0
      %p103 = por %p101, %p102
      %p104 = scmp.le.s32.totalorder 1, %s18
      %p105 = scmp.lt.s32.totalorder %s18, 3
      %p106 = pnand %p104, %p105
      %p107 = pneg %p106
      // Predicated region
      $region9: #{defaultnet_forward.13} parent=5 // pred_check
        _
      $region10: #{defaultnet_forward.13} parent=5 // pred_check_branch
        %109 = sbr.rel (%p106) target = $region12
      $region11: #{defaultnet_forward.13} parent=5 // pred_region
        %s110 = ssub.s32 %s18, 1
      $region12: #{defaultnet_forward.13} parent=5 // pred_fallthru
        _
      %p111 = scmp.lt.s32.totalorder %s18, 2
      // Predicated region
      $region13: #{defaultnet_forward.13} parent=5 // pred_check
        %p112 = pneg %p111
      $region14: #{defaultnet_forward.13} parent=5 // pred_check_branch
        %114 = sbr.rel (%p112) target = $region16
      $region15: #{defaultnet_forward.13} parent=5 // pred_region
        // Predicated region
        $region17: #{defaultnet_forward.13} parent=15 // pred_check
          %p115 = pneg %p38
        $region18: #{defaultnet_forward.13} parent=15 // pred_check_branch
          %117 = sbr.rel (%p115) target = $region20
        $region19: #{defaultnet_forward.13} parent=15 // pred_region
          %p118 = scmp.lt.s32.totalorder %s18, 1
          %s119 = scalar_select %p118, %s18, 1
          %s120 = smul.addr %s119, 6
          %s121 = smul.addr %s120, 8
          %s122 = scalar_lea.vmem %s1, %s121
        $region20: #{defaultnet_forward.13} parent=15 // pred_fallthru
          _
        // Predicated region
        $region21: #{defaultnet_forward.13} parent=15 // pred_check
          %p123 = pneg %p64
        $region22: #{defaultnet_forward.13} parent=15 // pred_check_branch
          %125 = sbr.rel (%p123) target = $region24
        $region23: #{defaultnet_forward.13} parent=15 // pred_region
          %p126 = scmp.lt.s32.totalorder %s18, 1
          %s127 = scalar_select %p126, %s18, 1
          %s128 = smul.addr %s127, 2
          %s129 = smul.addr %s128, 8
          %s130 = scalar_lea.vmem %s2, %s129
        $region24: #{defaultnet_forward.13} parent=15 // pred_fallthru
          _
      $region16: #{defaultnet_forward.13} parent=5 // pred_fallthru
        _
      %p131 = scmp.le.s32.totalorder 1, %s18
      %p132 = scmp.lt.s32.totalorder %s18, 3
      %p133 = pnand %p131, %p132
      %p134 = pneg %p133
      // Predicated region
      $region25: #{defaultnet_forward.13} parent=5 // pred_check
        _
      $region26: #{defaultnet_forward.13} parent=5 // pred_check_branch
        %136 = sbr.rel (%p133) target = $region28
      $region27: #{defaultnet_forward.13} parent=5 // pred_region
        %s137 = ssub.s32 %s18, 1
        %p138 = scmp.lt.s32.totalorder %s23, 1
        %s139 = scalar_select %p138, %s23, 1
        %s140 = smul.addr %s139, 6
        %s141 = smul.addr %s140, 8
        %s142 = scalar_lea.vmem %s1, %s141
        %p143 = pneg %p44
        %p144 = pneg %p41
        %p145 = scmp.lt.s32.totalorder %s23, 1
        %s146 = scalar_select %p145, %s23, 1
        %s147 = smul.addr %s146, 2
        %s148 = smul.addr %s147, 8
        %s149 = scalar_lea.vmem %s2, %s148
        %p150 = pneg %p70
        %p151 = pneg %p67
        %p152 = pneg %p96
        %p153 = pneg %p93
        %s154 = sand.u32 %s83, 1
        %s155 = scalar_lea.sflag [#allocation5], %s154
        %s156 = sand.u32 %s83, 1
        %s157 = smul.addr %s156, 48
        %s158 = scalar_lea.vmem [#allocation4], %s157
        %p159 = scmp.lt.s32.totalorder %s23, 1
        %s160 = scalar_select %p159, %s23, 1
        %s161 = smul.addr %s160, 6
        %s162 = smul.addr %s161, 8
        %s163 = scalar_lea.vmem %s1, %s162
        %p164 = scmp.lt.s32.totalorder %s23, 1
        %s165 = scalar_select %p164, %s23, 1
        %s166 = smul.addr %s165, 2
        %s167 = smul.addr %s166, 8
        %s168 = scalar_lea.vmem %s2, %s167
        %s169 = sld [smem:[#allocation3 + %s23]]
        %v170 = vld [vmem:[%s163] sm:$0xff]
        %v171 = vld [vmem:[%s163 + $0x8] sm:$0xff]
        %v172 = vld [vmem:[%s163 + $0x10] sm:$0xff]
        %v173 = vld [vmem:[%s163 + $0x18] sm:$0xff]
        %v174 = vld [vmem:[%s163 + $0x20] sm:$0xff]
        %v175 = vld [vmem:[%s163 + $0x28] sm:$0xff]
        %s176 = sadd.f32 %s169, 1.0
        %v177 = vstv %s176
        %v178 = vmul.f32 %v170, %v177
        %v179 = vmul.f32 %v171, %v177
        %v180 = vmul.f32 %v172, %v177
        %v181 = vmul.f32 %v173, %v177
        %v182 = vmul.f32 %v174, %v177
        %v183 = vmul.f32 %v175, %v177
        %v184 = vld [vmem:[%s168] sm:$0xff]
        %v185 = vld [vmem:[%s168 + $0x8] sm:$0xff]
        %v186 = vstv %s169
        %v187 = vadd.f32 %v186, %v184
        %v188 = vadd.f32 %v186, %v185
        %v189 = vrcp.pop %v187
        %v190 = vmul.f32 %v178, %v189
        %v191 = vrcp.pop %v188
        %v192 = vmul.f32 %v179, %v191
        %v193 = vmul.f32 %v180, %v189
        %v194 = vmul.f32 %v181, %v191
        %v195 = vmul.f32 %v182, %v189
        %v196 = vmul.f32 %v183, %v191
        %vm197 = vcmask 130048
        %198 = vst.msk [vmem:[%s158] sm:$0xff] %vm197, %v190
        %199 = vst.msk [vmem:[%s158 + $0x8] sm:$0xff] %vm197, %v192
        %200 = vst.msk [vmem:[%s158 + $0x10] sm:$0xff] %vm197, %v193
        %201 = vst.msk [vmem:[%s158 + $0x18] sm:$0xff] %vm197, %v194
        %202 = vst.msk [vmem:[%s158 + $0x20] sm:$0xff] %vm197, %v195
        %203 = vst.msk [vmem:[%s158 + $0x28] sm:$0xff] %vm197, %v196
        %s204 = sand.u32 %s83, 1
        %s205 = scalar_lea.sflag [#allocation5], %s204
        %s206 = sand.u32 %s83, 1
        %s207 = smul.addr %s206, 48
        %s208 = scalar_lea.vmem [#allocation4], %s207
        // Predicated region
        $region29: #{defaultnet_forward.13} parent=27 // pred_check
          %p209 = pneg %p93
        $region30: #{defaultnet_forward.13} parent=27 // pred_check_branch
          %211 = sbr.rel (%p209) target = $region32
        $region31: #{defaultnet_forward.13} parent=27 // pred_region
          %s213 = ssub.s32 768, 768
          %214 = vsyncadd %s205, %s213
          %s215 = smul.addr %s23, 6
          %s216 = smul.addr %s215, 128
          %s217 = scalar_lea.hbm %s3, %s216
          %s218 = sshll.u32 %s208, 4
          %s219 = int_to_ptr.vmem [resolvable:$true] %s218
          %224 = dma.vmem_to_hbm [thread:$0]  %s219, 768, %s217, %s205, 128, 128, 8
        $region32: #{defaultnet_forward.13} parent=27 // pred_fallthru
          _
      $region28: #{defaultnet_forward.13} parent=5 // pred_fallthru
        _
      %p225 = scmp.le.s32.totalorder 2, %s18
      // Predicated region
      $region33: #{defaultnet_forward.13} parent=5 // pred_check
        %p226 = pneg %p225
      $region34: #{defaultnet_forward.13} parent=5 // pred_check_branch
        %228 = sbr.rel (%p226) target = $region36
      $region35: #{defaultnet_forward.13} parent=5 // pred_region
        %s229 = ssub.s32 %s18, 2
        // Predicated region
        $region37: #{defaultnet_forward.13} parent=35 // pred_check
          %p230 = pneg %p99
        $region38: #{defaultnet_forward.13} parent=35 // pred_check_branch
          %232 = sbr.rel (%p230) target = $region40
        $region39: #{defaultnet_forward.13} parent=35 // pred_region
          %s233 = sand.u32 %s84, 1
          %s234 = scalar_lea.sflag [#allocation5], %s233
          %s235 = sand.u32 %s84, 1
          %s236 = smul.addr %s235, 48
          %s237 = scalar_lea.vmem [#allocation4], %s236
          %238 = dma.done %s234, 768
        $region40: #{defaultnet_forward.13} parent=35 // pred_fallthru
          _
      $region36: #{defaultnet_forward.13} parent=5 // pred_fallthru
        _
    $region6: #{defaultnet_forward.13} parent=1 // loop_footer
      %s22 = sadd.s32 1, %s18
    $region7: #{defaultnet_forward.13} parent=1 // loop_footer_branch
      %17 = sbr.rel target = $region3
    $region8: #{defaultnet_forward.13} parent=1 // loop_exit
      _
    %239 = vsyncpa [#allocation5], 1
    %s240 = scalar_lea.sflag [#allocation5], 1
    %241 = vsyncpa %s240, 1

</llo_original>
